<compile_context>
chip_gen: v6e
topology: v6e:2x2x1
jax: 0.10.0
libtpu: 0.0.40
codegen_flags: <defaults>
</compile_context>

<pallas_src>
import math

import jax
import jax.numpy as jnp
from jax.experimental import pallas as pl
from jax.experimental.pallas import tpu as pltpu


_DEFAULT_VMEM_CAP = 64 * 1024 * 1024  # v7x per-TensorCore VMEM (smallest current gen)


def _device_vmem_capacity_bytes():
    """Physical VMEM capacity of the current TPU generation.

    Narrow guard around the hardware-info query only (NOT around the
    pallas_call itself), falling back to the most conservative capacity.
    """
    get_info = getattr(pltpu, "get_tpu_info", None)
    if get_info is not None:
        try:
            cap = getattr(get_info(), "vmem_capacity_bytes", None)
            if cap:
                return int(cap)
        except Exception:
            pass
    return _DEFAULT_VMEM_CAP


def _lora_qkv_slice_kernel(x_ref, w_ref, b_ref, aq_ref, av_ref, bq_ref, bv_ref,
                           out_ref):
    """One (q|k|v slice, token tile) grid step.

    grid = (3, n_token_tiles); pl.program_id(0) selects the slice:
      j == 0 -> q (base projection + LoRA q)
      j == 1 -> k (base projection only)
      j == 2 -> v (base projection + LoRA v)
    """
    j = pl.program_id(0)
    x = x_ref[...]                                     # (TM, C), compute dtype

    # Base projection for this slice: (TM, C) @ (C, C) -> f32, + bias.
    y = jnp.dot(x, w_ref[...], preferred_element_type=jnp.float32) + b_ref[...]

    @pl.when(j == 0)
    def _():
        # LoRA q: rank-r path kept in f32 (K = r, negligible FLOPs).
        xa = jnp.dot(x, aq_ref[...], preferred_element_type=jnp.float32)   # (TM, r)
        new_q = jnp.dot(xa, bq_ref[...], preferred_element_type=jnp.float32)
        out_ref[...] = (y + new_q).astype(out_ref.dtype)

    @pl.when(j == 1)
    def _():
        out_ref[...] = y.astype(out_ref.dtype)

    @pl.when(j == 2)
    def _():
        xa = jnp.dot(x, av_ref[...], preferred_element_type=jnp.float32)   # (TM, r)
        new_v = jnp.dot(xa, bv_ref[...], preferred_element_type=jnp.float32)
        out_ref[...] = (y + new_v).astype(out_ref.dtype)


def prepare_lora_qkv_params(w_qkv, b_qkv, a_q, b_q, a_v, b_v, *,
                            compute_dtype=jnp.bfloat16):
    """One-time weight layout prep (hoisted out of the per-call hot path).

    PyTorch-layout inputs:
      w_qkv: (3C, C)   frozen qkv Linear weight
      b_qkv: (3C,)     frozen qkv Linear bias
      a_q, a_v: (r, C) LoRA down-projections
      b_q, b_v: (C, r) LoRA up-projections
    """
    threeC, C = w_qkv.shape
    assert threeC == 3 * C, (threeC, C)
    # Stack the q/k/v slices along a leading axis and pre-transpose each to
    # (in, out) so the kernel does row-major x @ W_slice^T on the MXU.
    w3 = jnp.swapaxes(w_qkv.reshape(3, C, C), 1, 2).astype(compute_dtype)   # (3, C, C)
    b3 = b_qkv.reshape(3, 1, C).astype(jnp.float32)                         # (3, 1, C)
    return dict(
        w3=w3,
        b3=b3,
        aq_t=a_q.T.astype(compute_dtype),   # (C, r)
        av_t=a_v.T.astype(compute_dtype),   # (C, r)
        bq_t=b_q.T.astype(jnp.float32),     # (r, C)  LoRA up-proj kept f32
        bv_t=b_v.T.astype(jnp.float32),     # (r, C)
    )


def lora_qkv_pallas(x, params, *, tile_m=512, out_dtype=None):
    """x: (B, H, W, C) channels-last SAM block input.
    params: dict from prepare_lora_qkv_params.
    Returns qkv: (B, H, W, 3C); dtype defaults to the weights' compute dtype."""
    w3, b3 = params["w3"], params["b3"]
    aq_t, av_t = params["aq_t"], params["av_t"]
    bq_t, bv_t = params["bq_t"], params["bv_t"]

    B, H, W, C = x.shape
    assert w3.shape == (3, C, C), (w3.shape, C)
    r = aq_t.shape[1]
    cd = w3.dtype
    if out_dtype is None:
        out_dtype = cd
    M = B * H * W

    # Token-tile size: multiple of 8 (sublanes), clamped to the token count.
    tile_m = min(int(tile_m), ((M + 7) // 8) * 8)
    tile_m = max(8, (tile_m // 8) * 8)
    n_i = pl.cdiv(M, tile_m)
    Mp = n_i * tile_m

    x2d = x.reshape(M, C).astype(cd)
    if Mp != M:
        x2d = jnp.pad(x2d, ((0, Mp - M), (0, 0)))

    # Generation-aware VMEM budget: double-buffered blocks + f32 temporaries
    # + headroom for Mosaic scratch, capped at 85% of physical VMEM.
    isz_cd = jnp.dtype(cd).itemsize
    isz_out = jnp.dtype(out_dtype).itemsize
    resident = (
        2 * C * C * isz_cd              # W_slice^T block
        + 2 * C * 4                     # bias block
        + 2 * tile_m * C * isz_cd       # x tile
        + 2 * tile_m * C * isz_out      # out tile
        + 2 * 2 * C * r * isz_cd        # A_q^T, A_v^T
        + 2 * 2 * r * C * 4             # B_q^T, B_v^T (f32)
    )
    temps = 3 * tile_m * C * 4          # y / LoRA-add f32 temporaries
    vmem_limit = resident + temps + (8 << 20)
    vmem_cap = int(0.85 * _device_vmem_capacity_bytes())
    vmem_limit = min(max(vmem_limit, 32 << 20), vmem_cap)

    # Slice axis OUTERMOST: each (C, C) weight slab is fetched from HBM once
    # (constant block index across the inner token-tile loop); only the smaller
    # x tiles are re-fetched per slice.
    grid = (3, n_i)

    in_specs = [
        pl.BlockSpec((tile_m, C), lambda j, i: (i, 0)),       # x tile
        pl.BlockSpec((None, C, C), lambda j, i: (j, 0, 0)),   # W_slice^T
        pl.BlockSpec((None, 1, C), lambda j, i: (j, 0, 0)),   # bias slice
        pl.BlockSpec((C, r), lambda j, i: (0, 0)),            # A_q^T
        pl.BlockSpec((C, r), lambda j, i: (0, 0)),            # A_v^T
        pl.BlockSpec((r, C), lambda j, i: (0, 0)),            # B_q^T (f32)
        pl.BlockSpec((r, C), lambda j, i: (0, 0)),            # B_v^T (f32)
    ]

    lane_aligned = (C % 128 == 0)
    if lane_aligned:
        # Write the (Mp, 3C) qkv layout directly (lane-dense, no post-shuffle).
        out_shape = jax.ShapeDtypeStruct((Mp, 3 * C), out_dtype)
        out_spec = pl.BlockSpec((tile_m, C), lambda j, i: (i, j))
    else:
        # Small / unaligned C: store per-slice (3, Mp, C) and interleave in XLA.
        out_shape = jax.ShapeDtypeStruct((3, Mp, C), out_dtype)
        out_spec = pl.BlockSpec((None, tile_m, C), lambda j, i: (j, i, 0))

    out = pl.pallas_call(
        _lora_qkv_slice_kernel,
        out_shape=out_shape,
        grid_spec=pltpu.PrefetchScalarGridSpec(
            num_scalar_prefetch=0,
            grid=grid,
            in_specs=in_specs,
            out_specs=out_spec,
        ),
        compiler_params=pltpu.CompilerParams(
            dimension_semantics=("parallel", "parallel"),
            vmem_limit_bytes=vmem_limit,
        ),
    )(x2d, w3, b3, aq_t, av_t, bq_t, bv_t)

    if not lane_aligned:
        out = jnp.transpose(out, (1, 0, 2)).reshape(Mp, 3 * C)
    if Mp != M:
        out = out[:M]
    return out.reshape(B, H, W, 3 * C)


def lora_qkv_pallas_from_raw(x, w_qkv, b_qkv, a_q, b_q, a_v, b_v, *,
                             tile_m=512, compute_dtype=jnp.bfloat16,
                             out_dtype=None):
    """Convenience wrapper from PyTorch-layout weights.

    NOTE: for production, call prepare_lora_qkv_params() once per block and
    reuse the params — this wrapper re-does the weight transpose/cast per call.
    """
    params = prepare_lora_qkv_params(w_qkv, b_qkv, a_q, b_q, a_v, b_v,
                                     compute_dtype=compute_dtype)
    return lora_qkv_pallas(x, params, tile_m=tile_m, out_dtype=out_dtype)


def lora_qkv_reference(x, w_qkv, b_qkv, a_q, b_q, a_v, b_v):
    """Pure-JAX f32 reference mirroring _LoRA_qkv.forward."""
    C = x.shape[-1]
    qkv = jnp.einsum('bhwc,oc->bhwo', x, w_qkv) + b_qkv
    new_q = jnp.einsum('bhwr,or->bhwo', jnp.einsum('bhwc,rc->bhwr', x, a_q), b_q)
    new_v = jnp.einsum('bhwr,or->bhwo', jnp.einsum('bhwc,rc->bhwr', x, a_v), b_v)
    qkv = qkv.at[..., :C].add(new_q)
    qkv = qkv.at[..., -C:].add(new_v)
    return qkv


def _make_inputs(key, B, H, W, C, r):
    k_x, k_w, k_b, k_aq, k_bq, k_av, k_bv = jax.random.split(key, 7)
    x = jax.random.normal(k_x, (B, H, W, C), jnp.float32)
    # Frozen base qkv Linear(C, 3C, bias=True): weight (3C, C), bias (3C,)
    w_qkv = jax.random.normal(k_w, (3 * C, C), jnp.float32) * (1.0 / math.sqrt(C))
    b_qkv = jax.random.normal(k_b, (3 * C,), jnp.float32) * 0.1
    # LoRA A: kaiming_uniform(a=sqrt(5)); B is zero-init in the module
    # (reset_parameters) — use small nonzero values so the LoRA path is exercised.
    bound_a = 1.0 / math.sqrt(C)
    a_q = jax.random.uniform(k_aq, (r, C), jnp.float32, -bound_a, bound_a)
    a_v = jax.random.uniform(k_av, (r, C), jnp.float32, -bound_a, bound_a)
    b_q = jax.random.uniform(k_bq, (C, r), jnp.float32, -0.1, 0.1)
    b_v = jax.random.uniform(k_bv, (C, r), jnp.float32, -0.1, 0.1)
    return x, w_qkv, b_qkv, a_q, b_q, a_v, b_v


if __name__ == "__main__":
    key = jax.random.PRNGKey(0)
    k_main, k_small = jax.random.split(key)

    # --- Main case: lane-aligned channels (SAM widths are all multiples of 128).
    B, H, W, C, r = 2, 16, 15, 128, 4           # M = 480 -> exercises M padding
    x, w_qkv, b_qkv, a_q, b_q, a_v, b_v = _make_inputs(k_main, B, H, W, C, r)
    ref = lora_qkv_reference(x, w_qkv, b_qkv, a_q, b_q, a_v, b_v)

    # Exact-precision path (f32 compute / f32 output), multiple token tiles.
    params_f32 = prepare_lora_qkv_params(w_qkv, b_qkv, a_q, b_q, a_v, b_v,
                                         compute_dtype=jnp.float32)
    out_f32 = lora_qkv_pallas(x, params_f32, tile_m=256)
    out_f32 = jax.block_until_ready(out_f32)
    assert out_f32.shape == (B, H, W, 3 * C), out_f32.shape
    assert jnp.allclose(out_f32, ref, atol=2e-3, rtol=2e-3), \
        float(jnp.max(jnp.abs(out_f32 - ref)))

    # Optimized path (bf16 MXU operands, f32 accumulation, bf16 output).
    params_bf16 = prepare_lora_qkv_params(w_qkv, b_qkv, a_q, b_q, a_v, b_v,
                                          compute_dtype=jnp.bfloat16)
    out_bf16 = lora_qkv_pallas(x, params_bf16, tile_m=512)
    out_bf16 = jax.block_until_ready(out_bf16)
    assert out_bf16.shape == (B, H, W, 3 * C), out_bf16.shape
    assert out_bf16.dtype == jnp.bfloat16
    assert jnp.allclose(out_bf16.astype(jnp.float32), ref, atol=1e-1, rtol=5e-2), \
        float(jnp.max(jnp.abs(out_bf16.astype(jnp.float32) - ref)))

    # --- Small / unaligned-channel case (C = 32): exercises the stacked-output
    # fallback path for channel counts that are not multiples of 128.
    Bs, Hs, Ws, Cs, rs = 1, 8, 9, 32, 4
    xs, w_s, b_s, aq_s, bq_s, av_s, bv_s = _make_inputs(k_small, Bs, Hs, Ws, Cs, rs)
    ref_s = lora_qkv_reference(xs, w_s, b_s, aq_s, bq_s, av_s, bv_s)
    out_s = lora_qkv_pallas_from_raw(xs, w_s, b_s, aq_s, bq_s, av_s, bv_s,
                                     tile_m=64, compute_dtype=jnp.float32)
    out_s = jax.block_until_ready(out_s)
    assert out_s.shape == (Bs, Hs, Ws, 3 * Cs), out_s.shape
    assert jnp.allclose(out_s, ref_s, atol=1e-3, rtol=1e-3), \
        float(jnp.max(jnp.abs(out_s - ref_s)))

    print("KERNEL_OK")
</pallas_src>

<mosaic_0001>
module attributes {stable_mosaic.version = 11 : i64} {
  func.func @_lora_qkv_slice_kernel(%arg0: i32, %arg1: i32, %arg2: memref<256x128xf32, #tpu.memory_space<vmem>>, %arg3: memref<1x128x128xf32, #tpu.memory_space<vmem>>, %arg4: memref<1x1x128xf32, #tpu.memory_space<vmem>>, %arg5: memref<128x4xf32, #tpu.memory_space<vmem>>, %arg6: memref<128x4xf32, #tpu.memory_space<vmem>>, %arg7: memref<4x128xf32, #tpu.memory_space<vmem>>, %arg8: memref<4x128xf32, #tpu.memory_space<vmem>>, %arg9: memref<256x128xf32, #tpu.memory_space<vmem>>) attributes {dimension_semantics = [#tpu.dimension_semantics<parallel>, #tpu.dimension_semantics<parallel>], iteration_bounds = array<i64: 3, 2>, scalar_prefetch = 0 : i64, scratch_operands = 0 : i64, tpu.core_type = #tpu.core_type<tc>, window_params = [{transform_indices = @transform_0, window_bounds = array<i64: 256, 128>}, {transform_indices = @transform_1, window_bounds = array<i64: 1, 128, 128>}, {transform_indices = @transform_2, window_bounds = array<i64: 1, 1, 128>}, {pipeline_mode = #tpu.pipeline_mode<synchronous>, transform_indices = @transform_3, window_bounds = array<i64: 128, 4>}, {pipeline_mode = #tpu.pipeline_mode<synchronous>, transform_indices = @transform_4, window_bounds = array<i64: 128, 4>}, {pipeline_mode = #tpu.pipeline_mode<synchronous>, transform_indices = @transform_5, window_bounds = array<i64: 4, 128>}, {pipeline_mode = #tpu.pipeline_mode<synchronous>, transform_indices = @transform_6, window_bounds = array<i64: 4, 128>}, {transform_indices = @transform_7, window_bounds = array<i64: 256, 128>}]} {
    %c0 = arith.constant 0 : index
    %c0_0 = arith.constant 0 : index
    %0 = vector.load %arg2[%c0, %c0_0] : memref<256x128xf32, #tpu.memory_space<vmem>>, vector<256x128xf32>
    %c0_1 = arith.constant 0 : index
    %c0_2 = arith.constant 0 : index
    %c0_3 = arith.constant 0 : index
    %1 = vector.load %arg3[%c0_1, %c0_2, %c0_3] : memref<1x128x128xf32, #tpu.memory_space<vmem>>, vector<1x128x128xf32>
    %2 = vector.shape_cast %1 : vector<1x128x128xf32> to vector<128x128xf32>
    %cst = arith.constant dense<0.000000e+00> : vector<256x128xf32>
    %3 = tpu.matmul %0, %2, %cst {dimension_numbers = #tpu.dot_dimension_numbers<[1], [0], [0], [1], [0, 0, 1, 1], [], []>} : vector<256x128xf32>, vector<128x128xf32>, vector<256x128xf32> -> vector<256x128xf32>
    %c0_4 = arith.constant 0 : index
    %c0_5 = arith.constant 0 : index
    %c0_6 = arith.constant 0 : index
    %4 = vector.load %arg4[%c0_4, %c0_5, %c0_6] : memref<1x1x128xf32, #tpu.memory_space<vmem>>, vector<1x1x128xf32>
    %5 = vector.shape_cast %4 : vector<1x1x128xf32> to vector<1x128xf32>
    %6 = vector.broadcast %5 : vector<1x128xf32> to vector<256x128xf32>
    %7 = arith.addf %3, %6 : vector<256x128xf32>
    %c0_i32 = arith.constant 0 : i32
    %8 = arith.cmpi eq, %arg0, %c0_i32 : i32
    %9 = arith.extui %8 : i1 to i32
    %c0_i32_7 = arith.constant 0 : i32
    %10 = arith.cmpi ne, %9, %c0_i32_7 : i32
    scf.if %10 {
      %c0_10 = arith.constant 0 : index
      %c0_11 = arith.constant 0 : index
      %17 = vector.load %arg5[%c0_10, %c0_11] : memref<128x4xf32, #tpu.memory_space<vmem>>, vector<128x4xf32>
      %cst_12 = arith.constant dense<0.000000e+00> : vector<256x4xf32>
      %18 = tpu.matmul %0, %17, %cst_12 {dimension_numbers = #tpu.dot_dimension_numbers<[1], [0], [0], [1], [0, 0, 1, 1], [], []>} : vector<256x128xf32>, vector<128x4xf32>, vector<256x4xf32> -> vector<256x4xf32>
      %c0_13 = arith.constant 0 : index
      %c0_14 = arith.constant 0 : index
      %19 = vector.load %arg7[%c0_13, %c0_14] : memref<4x128xf32, #tpu.memory_space<vmem>>, vector<4x128xf32>
      %cst_15 = arith.constant dense<0.000000e+00> : vector<256x128xf32>
      %20 = tpu.matmul %18, %19, %cst_15 {dimension_numbers = #tpu.dot_dimension_numbers<[1], [0], [0], [1], [0, 0, 1, 1], [], []>} : vector<256x4xf32>, vector<4x128xf32>, vector<256x128xf32> -> vector<256x128xf32>
      %21 = arith.addf %7, %20 : vector<256x128xf32>
      %c0_16 = arith.constant 0 : index
      %c0_17 = arith.constant 0 : index
      %22 = vector.load %arg9[%c0_16, %c0_17] : memref<256x128xf32, #tpu.memory_space<vmem>>, vector<256x128xf32>
      tpu.vector_store %arg9[%c0_16, %c0_17], %21 {strides = array<i32>} : memref<256x128xf32, #tpu.memory_space<vmem>>, vector<256x128xf32>,
    } else {
    }
    %c1_i32 = arith.constant 1 : i32
    %11 = arith.cmpi eq, %arg0, %c1_i32 : i32
    %12 = arith.extui %11 : i1 to i32
    %c0_i32_8 = arith.constant 0 : i32
    %13 = arith.cmpi ne, %12, %c0_i32_8 : i32
    scf.if %13 {
      %c0_10 = arith.constant 0 : index
      %c0_11 = arith.constant 0 : index
      %17 = vector.load %arg9[%c0_10, %c0_11] : memref<256x128xf32, #tpu.memory_space<vmem>>, vector<256x128xf32>
      tpu.vector_store %arg9[%c0_10, %c0_11], %7 {strides = array<i32>} : memref<256x128xf32, #tpu.memory_space<vmem>>, vector<256x128xf32>,
    } else {
    }
    %c2_i32 = arith.constant 2 : i32
    %14 = arith.cmpi eq, %arg0, %c2_i32 : i32
    %15 = arith.extui %14 : i1 to i32
    %c0_i32_9 = arith.constant 0 : i32
    %16 = arith.cmpi ne, %15, %c0_i32_9 : i32
    scf.if %16 {
      %c0_10 = arith.constant 0 : index
      %c0_11 = arith.constant 0 : index
      %17 = vector.load %arg6[%c0_10, %c0_11] : memref<128x4xf32, #tpu.memory_space<vmem>>, vector<128x4xf32>
      %cst_12 = arith.constant dense<0.000000e+00> : vector<256x4xf32>
      %18 = tpu.matmul %0, %17, %cst_12 {dimension_numbers = #tpu.dot_dimension_numbers<[1], [0], [0], [1], [0, 0, 1, 1], [], []>} : vector<256x128xf32>, vector<128x4xf32>, vector<256x4xf32> -> vector<256x4xf32>
      %c0_13 = arith.constant 0 : index
      %c0_14 = arith.constant 0 : index
      %19 = vector.load %arg8[%c0_13, %c0_14] : memref<4x128xf32, #tpu.memory_space<vmem>>, vector<4x128xf32>
      %cst_15 = arith.constant dense<0.000000e+00> : vector<256x128xf32>
      %20 = tpu.matmul %18, %19, %cst_15 {dimension_numbers = #tpu.dot_dimension_numbers<[1], [0], [0], [1], [0, 0, 1, 1], [], []>} : vector<256x4xf32>, vector<4x128xf32>, vector<256x128xf32> -> vector<256x128xf32>
      %21 = arith.addf %7, %20 : vector<256x128xf32>
      %c0_16 = arith.constant 0 : index
      %c0_17 = arith.constant 0 : index
      %22 = vector.load %arg9[%c0_16, %c0_17] : memref<256x128xf32, #tpu.memory_space<vmem>>, vector<256x128xf32>
      tpu.vector_store %arg9[%c0_16, %c0_17], %21 {strides = array<i32>} : memref<256x128xf32, #tpu.memory_space<vmem>>, vector<256x128xf32>,
    } else {
    }
    return
  }
  func.func @transform_0(%arg0: i32, %arg1: i32) -> (i32, i32) {
    %c0_i32 = arith.constant 0 : i32
    %c0_i32_0 = arith.constant 0 : i32
    return %arg1, %c0_i32 : i32, i32
  }
  func.func @transform_1(%arg0: i32, %arg1: i32) -> (i32, i32, i32) {
    %c0_i32 = arith.constant 0 : i32
    %c0_i32_0 = arith.constant 0 : i32
    %c0_i32_1 = arith.constant 0 : i32
    return %arg0, %c0_i32, %c0_i32_0 : i32, i32, i32
  }
  func.func @transform_2(%arg0: i32, %arg1: i32) -> (i32, i32, i32) {
    %c0_i32 = arith.constant 0 : i32
    %c0_i32_0 = arith.constant 0 : i32
    %c0_i32_1 = arith.constant 0 : i32
    return %arg0, %c0_i32, %c0_i32_0 : i32, i32, i32
  }
  func.func @transform_3(%arg0: i32, %arg1: i32) -> (i32, i32) {
    %c0_i32 = arith.constant 0 : i32
    %c0_i32_0 = arith.constant 0 : i32
    %c0_i32_1 = arith.constant 0 : i32
    return %c0_i32, %c0_i32_0 : i32, i32
  }
  func.func @transform_4(%arg0: i32, %arg1: i32) -> (i32, i32) {
    %c0_i32 = arith.constant 0 : i32
    %c0_i32_0 = arith.constant 0 : i32
    %c0_i32_1 = arith.constant 0 : i32
    return %c0_i32, %c0_i32_0 : i32, i32
  }
  func.func @transform_5(%arg0: i32, %arg1: i32) -> (i32, i32) {
    %c0_i32 = arith.constant 0 : i32
    %c0_i32_0 = arith.constant 0 : i32
    %c0_i32_1 = arith.constant 0 : i32
    return %c0_i32, %c0_i32_0 : i32, i32
  }
  func.func @transform_6(%arg0: i32, %arg1: i32) -> (i32, i32) {
    %c0_i32 = arith.constant 0 : i32
    %c0_i32_0 = arith.constant 0 : i32
    %c0_i32_1 = arith.constant 0 : i32
    return %c0_i32, %c0_i32_0 : i32, i32
  }
  func.func @transform_7(%arg0: i32, %arg1: i32) -> (i32, i32) {
    %c0_i32 = arith.constant 0 : i32
    return %arg1, %arg0 : i32, i32
  }
}

</mosaic_0001>

<llo_original>
// kernel: tpu_custom_call.1
$region0: #{tpu_custom_call.1}
  #allocation0 [shape = 'u32[]', space=smem, size = 0x4, offset = 0x4, fixed_abs, tag = 'smem constant byte address 0x4 - core index']
  #allocation1 [shape = 'u32[144,128]{1,0:T(1,128)}', space=vmem, size = 0x12000, scoped, tag = 'internal scratch']
  %s0 = inlined_call_operand.hbm [shape: f32[512,128], index: 0, kind: input, shape index: {}]
  %s1 = inlined_call_operand.hbm [shape: f32[3,128,128], index: 1, kind: input, shape index: {}]
  %s2 = inlined_call_operand.vmem [shape: f32[3,1,128], index: 2, kind: input, shape index: {}]
  %s3 = inlined_call_operand.vmem [shape: f32[128,4], index: 3, kind: input, shape index: {}]
  %s4 = inlined_call_operand.vmem [shape: f32[128,4], index: 4, kind: input, shape index: {}]
  %s5 = inlined_call_operand.vmem [shape: f32[4,128], index: 5, kind: input, shape index: {}]
  %s6 = inlined_call_operand.vmem [shape: f32[4,128], index: 6, kind: input, shape index: {}]
  %s7 = inlined_call_operand.hbm [shape: f32[512,384], index: 7, kind: output, shape index: {}]
  %s8 = sld [smem:[#allocation0]]
  $region81: #{tpu_custom_call.1} parent=0
    _
  %s10 = ssub.s32 1, %s8
  %s11 = scalar_select 0, %s10, %s8
  $region1: #{tpu_custom_call.1} parent=0
    #allocation2 [shape = 'u8[262144]{0}', space=vmem, size = 0x40000, scoped, tag = 'input window, operand 0']
    #allocation3 [shape = 's32[2]{0}', space=sflag, size = 0x8, scoped, tag = 'scoped memory for tpu_custom_call.1']
    #allocation4 [shape = 's32[2]{0}', space=sflag, size = 0x8, scoped, tag = 'scoped memory for tpu_custom_call.1']
    #allocation5 [shape = 'u8[131072]{0}', space=vmem, size = 0x20000, scoped, tag = 'input window, operand 1']
    #allocation6 [shape = 's32[2]{0}', space=sflag, size = 0x8, scoped, tag = 'scoped memory for tpu_custom_call.1']
    #allocation7 [shape = 'u8[262144]{0}', space=vmem, size = 0x40000, scoped, tag = 'output window, operand 0']
    %12 = vsyncpa [#allocation3], 0
    %s13 = scalar_lea.sflag [#allocation3], 1
    %14 = vsyncpa %s13, 0
    %15 = vsyncpa [#allocation6], 0
    %s16 = scalar_lea.sflag [#allocation6], 1
    %17 = vsyncpa %s16, 0
    %18 = vsyncpa [#allocation4], 0
    %s19 = scalar_lea.sflag [#allocation4], 1
    %20 = vsyncpa %s19, 0
    loop: start=0, step=1, limit=8
    $region2: #{tpu_custom_call.1} parent=1 // loop_pre_header
      _
    $region3: #{tpu_custom_call.1} parent=1 // loop_header
      %s22 = sphi 0, %s26
      %p23 = scmp.ge.s32.totalorder %s22, 8
      %s29 = sphi 0, %s41
      %s30 = sphi 0, %s37
      %s31 = sphi 0, %s29
      %s32 = sphi 0, %s30
      %s33 = sphi 0, %s31
      %s34 = sphi 0, %s32
      %s44 = sphi 0, %s46
      %s47 = sphi 0, %s44
      %s48 = sphi 0, %s47
      %s64 = sphi 0, %s48
      %s70 = sphi 0, %s72
      %s73 = sphi 0, %s70
      %s74 = sphi 0, %s73
      %s90 = sphi 0, %s74
      %s96 = sphi 0, %s98
      %s99 = sphi 0, %s96
      %s100 = sphi 0, %s99
      %s116 = sphi 0, %s100
      %s120 = sphi 0, %s120
      %s122 = sphi 0, %s120
      %s123 = sphi 0, %s122
      %s137 = sphi 0, %s123
      %s141 = sphi 0, %s141
      %s143 = sphi 0, %s141
      %s144 = sphi 0, %s143
      %s158 = sphi 0, %s144
      %s162 = sphi 0, %s162
      %s164 = sphi 0, %s162
      %s165 = sphi 0, %s164
      %s179 = sphi 0, %s165
      %s183 = sphi 0, %s183
      %s185 = sphi 0, %s183
      %s186 = sphi 0, %s185
      %s200 = sphi 0, %s186
      %s208 = sphi 0, %s210
      %s211 = sphi 0, %s208
      %s212 = sphi 0, %s211
      %s228 = sphi 0, %s212
    $region4: #{tpu_custom_call.1} parent=1 // loop_header_branch
      %25 = sbr.rel (%p23) target = $region8
    $region5: #{tpu_custom_call.1} parent=1 // loop_body
      %s27 = ssub.s32 %s22, 1
      %s28 = ssub.s32 %s22, 2
      %s35 = sadd.s32 1, %s30
      %p36 = scmp.ge.s32.totalorder %s35, 2
      %s37 = scalar_select %p36, 0, %s35
      %s38 = sadd.s32 1, %s29
      %s39 = scalar_select %p36, %s38, %s29
      %p40 = scmp.ge.s32.totalorder %s39, 3
      %s41 = scalar_select %p40, 0, %s39
      %s42 = ssub.s32 %s30, %s37
      %p43 = scmp.eq.s32.totalorder %s42, 0
      %s45 = sadd.s32 %s44, 1
      %s46 = scalar_select %p43, %s44, %s45
      %p49 = pneg %p43
      %p50 = scmp.eq.s32.totalorder %s22, 5
      %p51 = por %p49, %p50
      %p52 = scmp.ne.s32.totalorder %s44, %s47
      %p53 = scmp.eq.s32.totalorder %s22, 0
      %p54 = por %p52, %p53
      %p55 = scmp.ne.s32.totalorder %s44, %s47
      %p56 = scmp.eq.s32.totalorder %s27, 5
      %p57 = por %p55, %p56
      %p58 = scmp.ne.s32.totalorder %s47, %s48
      %p59 = scmp.eq.s32.totalorder %s27, 0
      %p60 = por %p58, %p59
      %p61 = scmp.ne.s32.totalorder %s47, %s48
      %p62 = scmp.eq.s32.totalorder %s28, 5
      %p63 = por %p61, %p62
      %p65 = scmp.ne.s32.totalorder %s48, %s64
      %p66 = scmp.eq.s32.totalorder %s28, 0
      %p67 = por %p65, %p66
      %s68 = ssub.s32 %s29, %s41
      %p69 = scmp.eq.s32.totalorder %s68, 0
      %s71 = sadd.s32 %s70, 1
      %s72 = scalar_select %p69, %s70, %s71
      %p75 = pneg %p69
      %p76 = scmp.eq.s32.totalorder %s22, 5
      %p77 = por %p75, %p76
      %p78 = scmp.ne.s32.totalorder %s70, %s73
      %p79 = scmp.eq.s32.totalorder %s22, 0
      %p80 = por %p78, %p79
      %p81 = scmp.ne.s32.totalorder %s70, %s73
      %p82 = scmp.eq.s32.totalorder %s27, 5
      %p83 = por %p81, %p82
      %p84 = scmp.ne.s32.totalorder %s73, %s74
      %p85 = scmp.eq.s32.totalorder %s27, 0
      %p86 = por %p84, %p85
      %p87 = scmp.ne.s32.totalorder %s73, %s74
      %p88 = scmp.eq.s32.totalorder %s28, 5
      %p89 = por %p87, %p88
      %p91 = scmp.ne.s32.totalorder %s74, %s90
      %p92 = scmp.eq.s32.totalorder %s28, 0
      %p93 = por %p91, %p92
      %s94 = ssub.s32 %s29, %s41
      %p95 = scmp.eq.s32.totalorder %s94, 0
      %s97 = sadd.s32 %s96, 1
      %s98 = scalar_select %p95, %s96, %s97
      %p101 = pneg %p95
      %p102 = scmp.eq.s32.totalorder %s22, 5
      %p103 = por %p101, %p102
      %p104 = scmp.ne.s32.totalorder %s96, %s99
      %p105 = scmp.eq.s32.totalorder %s22, 0
      %p106 = por %p104, %p105
      %p107 = scmp.ne.s32.totalorder %s96, %s99
      %p108 = scmp.eq.s32.totalorder %s27, 5
      %p109 = por %p107, %p108
      %p110 = scmp.ne.s32.totalorder %s99, %s100
      %p111 = scmp.eq.s32.totalorder %s27, 0
      %p112 = por %p110, %p111
      %p113 = scmp.ne.s32.totalorder %s99, %s100
      %p114 = scmp.eq.s32.totalorder %s28, 5
      %p115 = por %p113, %p114
      %p117 = scmp.ne.s32.totalorder %s100, %s116
      %p118 = scmp.eq.s32.totalorder %s28, 0
      %p119 = por %p117, %p118
      %s121 = sadd.s32 %s120, 1
      %p124 = scmp.eq.s32.totalorder %s22, 5
      %p125 = scmp.ne.s32.totalorder %s120, %s122
      %p126 = scmp.eq.s32.totalorder %s22, 0
      %p127 = por %p125, %p126
      %p128 = scmp.ne.s32.totalorder %s120, %s122
      %p129 = scmp.eq.s32.totalorder %s27, 5
      %p130 = por %p128, %p129
      %p131 = scmp.ne.s32.totalorder %s122, %s123
      %p132 = scmp.eq.s32.totalorder %s27, 0
      %p133 = por %p131, %p132
      %p134 = scmp.ne.s32.totalorder %s122, %s123
      %p135 = scmp.eq.s32.totalorder %s28, 5
      %p136 = por %p134, %p135
      %p138 = scmp.ne.s32.totalorder %s123, %s137
      %p139 = scmp.eq.s32.totalorder %s28, 0
      %p140 = por %p138, %p139
      %s142 = sadd.s32 %s141, 1
      %p145 = scmp.eq.s32.totalorder %s22, 5
      %p146 = scmp.ne.s32.totalorder %s141, %s143
      %p147 = scmp.eq.s32.totalorder %s22, 0
      %p148 = por %p146, %p147
      %p149 = scmp.ne.s32.totalorder %s141, %s143
      %p150 = scmp.eq.s32.totalorder %s27, 5
      %p151 = por %p149, %p150
      %p152 = scmp.ne.s32.totalorder %s143, %s144
      %p153 = scmp.eq.s32.totalorder %s27, 0
      %p154 = por %p152, %p153
      %p155 = scmp.ne.s32.totalorder %s143, %s144
      %p156 = scmp.eq.s32.totalorder %s28, 5
      %p157 = por %p155, %p156
      %p159 = scmp.ne.s32.totalorder %s144, %s158
      %p160 = scmp.eq.s32.totalorder %s28, 0
      %p161 = por %p159, %p160
      %s163 = sadd.s32 %s162, 1
      %p166 = scmp.eq.s32.totalorder %s22, 5
      %p167 = scmp.ne.s32.totalorder %s162, %s164
      %p168 = scmp.eq.s32.totalorder %s22, 0
      %p169 = por %p167, %p168
      %p170 = scmp.ne.s32.totalorder %s162, %s164
      %p171 = scmp.eq.s32.totalorder %s27, 5
      %p172 = por %p170, %p171
      %p173 = scmp.ne.s32.totalorder %s164, %s165
      %p174 = scmp.eq.s32.totalorder %s27, 0
      %p175 = por %p173, %p174
      %p176 = scmp.ne.s32.totalorder %s164, %s165
      %p177 = scmp.eq.s32.totalorder %s28, 5
      %p178 = por %p176, %p177
      %p180 = scmp.ne.s32.totalorder %s165, %s179
      %p181 = scmp.eq.s32.totalorder %s28, 0
      %p182 = por %p180, %p181
      %s184 = sadd.s32 %s183, 1
      %p187 = scmp.eq.s32.totalorder %s22, 5
      %p188 = scmp.ne.s32.totalorder %s183, %s185
      %p189 = scmp.eq.s32.totalorder %s22, 0
      %p190 = por %p188, %p189
      %p191 = scmp.ne.s32.totalorder %s183, %s185
      %p192 = scmp.eq.s32.totalorder %s27, 5
      %p193 = por %p191, %p192
      %p194 = scmp.ne.s32.totalorder %s185, %s186
      %p195 = scmp.eq.s32.totalorder %s27, 0
      %p196 = por %p194, %p195
      %p197 = scmp.ne.s32.totalorder %s185, %s186
      %p198 = scmp.eq.s32.totalorder %s28, 5
      %p199 = por %p197, %p198
      %p201 = scmp.ne.s32.totalorder %s186, %s200
      %p202 = scmp.eq.s32.totalorder %s28, 0
      %p203 = por %p201, %p202
      %s204 = ssub.s32 %s30, %s37
      %s205 = ssub.s32 %s29, %s41
      %s206 = sor.u32 %s204, %s205
      %p207 = scmp.eq.s32.totalorder %s206, 0
      %s209 = sadd.s32 %s208, 1
      %s210 = scalar_select %p207, %s208, %s209
      %p213 = pneg %p207
      %p214 = scmp.eq.s32.totalorder %s22, 5
      %p215 = por %p213, %p214
      %p216 = scmp.ne.s32.totalorder %s208, %s211
      %p217 = scmp.eq.s32.totalorder %s22, 0
      %p218 = por %p216, %p217
      %p219 = scmp.ne.s32.totalorder %s208, %s211
      %p220 = scmp.eq.s32.totalorder %s27, 5
      %p221 = por %p219, %p220
      %p222 = scmp.ne.s32.totalorder %s211, %s212
      %p223 = scmp.eq.s32.totalorder %s27, 0
      %p224 = por %p222, %p223
      %p225 = scmp.ne.s32.totalorder %s211, %s212
      %p226 = scmp.eq.s32.totalorder %s28, 5
      %p227 = por %p225, %p226
      %p229 = scmp.ne.s32.totalorder %s212, %s228
      %p230 = scmp.eq.s32.totalorder %s28, 0
      %p231 = por %p229, %p230
      %p232 = scmp.le.s32.totalorder 1, %s22
      %p233 = scmp.lt.s32.totalorder %s22, 7
      %p234 = pnand %p232, %p233
      %p235 = pneg %p234
      // Predicated region
      $region9: #{tpu_custom_call.1} parent=5 // pred_check
        _
      $region10: #{tpu_custom_call.1} parent=5 // pred_check_branch
        %237 = sbr.rel (%p234) target = $region12
      $region11: #{tpu_custom_call.1} parent=5 // pred_region
        %s238 = ssub.s32 %s22, 1
        // Predicated region
        $region13: #{tpu_custom_call.1} parent=11 // pred_check
          %p239 = pneg %p133
        $region14: #{tpu_custom_call.1} parent=11 // pred_check_branch
          %241 = sbr.rel (%p239) target = $region16
        $region15: #{tpu_custom_call.1} parent=11 // pred_region
          _
        $region16: #{tpu_custom_call.1} parent=11 // pred_fallthru
          _
        // Predicated region
        $region17: #{tpu_custom_call.1} parent=11 // pred_check
          %p242 = pneg %p154
        $region18: #{tpu_custom_call.1} parent=11 // pred_check_branch
          %244 = sbr.rel (%p242) target = $region20
        $region19: #{tpu_custom_call.1} parent=11 // pred_region
          _
        $region20: #{tpu_custom_call.1} parent=11 // pred_fallthru
          _
        // Predicated region
        $region21: #{tpu_custom_call.1} parent=11 // pred_check
          %p245 = pneg %p175
        $region22: #{tpu_custom_call.1} parent=11 // pred_check_branch
          %247 = sbr.rel (%p245) target = $region24
        $region23: #{tpu_custom_call.1} parent=11 // pred_region
          _
        $region24: #{tpu_custom_call.1} parent=11 // pred_fallthru
          _
        // Predicated region
        $region25: #{tpu_custom_call.1} parent=11 // pred_check
          %p248 = pneg %p196
        $region26: #{tpu_custom_call.1} parent=11 // pred_check_branch
          %250 = sbr.rel (%p248) target = $region28
        $region27: #{tpu_custom_call.1} parent=11 // pred_region
          _
        $region28: #{tpu_custom_call.1} parent=11 // pred_fallthru
          _
      $region12: #{tpu_custom_call.1} parent=5 // pred_fallthru
        _
      %p251 = scmp.lt.s32.totalorder %s22, 6
      // Predicated region
      $region29: #{tpu_custom_call.1} parent=5 // pred_check
        %p252 = pneg %p251
      $region30: #{tpu_custom_call.1} parent=5 // pred_check_branch
        %254 = sbr.rel (%p252) target = $region32
      $region31: #{tpu_custom_call.1} parent=5 // pred_region
        // Predicated region
        $region33: #{tpu_custom_call.1} parent=31 // pred_check
          %p255 = pneg %p54
        $region34: #{tpu_custom_call.1} parent=31 // pred_check_branch
          %257 = sbr.rel (%p255) target = $region36
        $region35: #{tpu_custom_call.1} parent=31 // pred_region
          %s258 = sand.u32 %s44, 1
          %s259 = scalar_lea.sflag [#allocation3], %s258
          %s260 = sand.u32 %s44, 1
          %s261 = smul.addr %s260, 256
          %s262 = scalar_lea.vmem [#allocation2], %s261
          %s263 = smul.u32 32, %s30
          %s265 = ssub.s32 4096, 4096
          %266 = vsyncadd %s259, %s265
          %s267 = smul.addr %s263, 128
          %s268 = scalar_lea.hbm %s0, %s267
          %s269 = sshll.u32 %s262, 4
          %s270 = int_to_ptr.vmem [resolvable:$true] %s269
          %275 = dma.hbm_to_vmem [thread:$0]  %s268, 4096, %s270, %s259, 128, 128, 8
        $region36: #{tpu_custom_call.1} parent=31 // pred_fallthru
          _
        // Predicated region
        $region37: #{tpu_custom_call.1} parent=31 // pred_check
          %p276 = pneg %p80
        $region38: #{tpu_custom_call.1} parent=31 // pred_check_branch
          %278 = sbr.rel (%p276) target = $region40
        $region39: #{tpu_custom_call.1} parent=31 // pred_region
          %s279 = sand.u32 %s70, 1
          %s280 = scalar_lea.sflag [#allocation6], %s279
          %s281 = sand.u32 %s70, 1
          %s282 = smul.addr %s281, 128
          %s283 = scalar_lea.vmem [#allocation5], %s282
          %s285 = ssub.s32 2048, 2048
          %286 = vsyncadd %s280, %s285
          %s287 = smul.addr %s29, 16
          %s288 = smul.addr %s287, 128
          %s289 = scalar_lea.hbm %s1, %s288
          %s290 = sshll.u32 %s283, 4
          %s291 = int_to_ptr.vmem [resolvable:$true] %s290
          %296 = dma.hbm_to_vmem [thread:$0]  %s289, 2048, %s291, %s280, 128, 128, 8
        $region40: #{tpu_custom_call.1} parent=31 // pred_fallthru
          _
        // Predicated region
        $region41: #{tpu_custom_call.1} parent=31 // pred_check
          %p297 = pneg %p106
        $region42: #{tpu_custom_call.1} parent=31 // pred_check_branch
          %299 = sbr.rel (%p297) target = $region44
        $region43: #{tpu_custom_call.1} parent=31 // pred_region
          %p300 = scmp.lt.s32.totalorder %s29, 2
          %s301 = scalar_select %p300, %s29, 2
          %s302 = scalar_lea.vmem %s2, %s301
        $region44: #{tpu_custom_call.1} parent=31 // pred_fallthru
          _
      $region32: #{tpu_custom_call.1} parent=5 // pred_fallthru
        _
      %p303 = scmp.le.s32.totalorder 1, %s22
      %p304 = scmp.lt.s32.totalorder %s22, 7
      %p305 = pnand %p303, %p304
      %p306 = pneg %p305
      // Predicated region
      $region45: #{tpu_custom_call.1} parent=5 // pred_check
        _
      $region46: #{tpu_custom_call.1} parent=5 // pred_check_branch
        %308 = sbr.rel (%p305) target = $region48
      $region47: #{tpu_custom_call.1} parent=5 // pred_region
        %s309 = ssub.s32 %s22, 1
        %s310 = sand.u32 %s47, 1
        %s311 = scalar_lea.sflag [#allocation3], %s310
        %s312 = sand.u32 %s47, 1
        %s313 = smul.addr %s312, 256
        %s314 = scalar_lea.vmem [#allocation2], %s313
        // Predicated region
        $region49: #{tpu_custom_call.1} parent=47 // pred_check
          %p315 = pneg %p60
        $region50: #{tpu_custom_call.1} parent=47 // pred_check_branch
          %317 = sbr.rel (%p315) target = $region52
        $region51: #{tpu_custom_call.1} parent=47 // pred_region
          %318 = dma.done %s311, 4096
        $region52: #{tpu_custom_call.1} parent=47 // pred_fallthru
          _
        %s319 = sand.u32 %s73, 1
        %s320 = scalar_lea.sflag [#allocation6], %s319
        %s321 = sand.u32 %s73, 1
        %s322 = smul.addr %s321, 128
        %s323 = scalar_lea.vmem [#allocation5], %s322
        // Predicated region
        $region53: #{tpu_custom_call.1} parent=47 // pred_check
          %p324 = pneg %p86
        $region54: #{tpu_custom_call.1} parent=47 // pred_check_branch
          %326 = sbr.rel (%p324) target = $region56
        $region55: #{tpu_custom_call.1} parent=47 // pred_region
          %327 = dma.done %s320, 2048
        $region56: #{tpu_custom_call.1} parent=47 // pred_fallthru
          _
        %s328 = sand.u32 %s47, 1
        %s329 = scalar_lea.sflag [#allocation3], %s328
        %s330 = sand.u32 %s47, 1
        %s331 = smul.addr %s330, 256
        %s332 = scalar_lea.vmem [#allocation2], %s331
        %p333 = pneg %p60
        %p334 = pneg %p57
        %s335 = sand.u32 %s73, 1
        %s336 = scalar_lea.sflag [#allocation6], %s335
        %s337 = sand.u32 %s73, 1
        %s338 = smul.addr %s337, 128
        %s339 = scalar_lea.vmem [#allocation5], %s338
        %p340 = pneg %p86
        %p341 = pneg %p83
        %p342 = scmp.lt.s32.totalorder %s31, 2
        %s343 = scalar_select %p342, %s31, 2
        %s344 = scalar_lea.vmem %s2, %s343
        %p345 = pneg %p112
        %p346 = pneg %p109
        %p347 = pneg %p133
        %p348 = pneg %p130
        %p349 = pneg %p154
        %p350 = pneg %p151
        %p351 = pneg %p175
        %p352 = pneg %p172
        %p353 = pneg %p196
        %p354 = pneg %p193
        %p355 = pneg %p224
        %p356 = pneg %p221
        %s357 = sand.u32 %s211, 1
        %s358 = scalar_lea.sflag [#allocation4], %s357
        %s359 = sand.u32 %s211, 1
        %s360 = smul.addr %s359, 256
        %s361 = scalar_lea.vmem [#allocation7], %s360
        %s362 = smul.u32 32, %s32
        %p363 = scmp.lt.s32.totalorder %s31, 2
        %s364 = scalar_select %p363, %s31, 2
        %s365 = scalar_lea.vmem %s2, %s364
        %s366 = smul.u32 32, %s32
        %v367 = vld [vmem:[%s314] sm:$0xff]
        %v368 = vld [vmem:[%s314 + $0x8] sm:$0xff]
        %v369 = vld [vmem:[%s314 + $0x10] sm:$0xff]
        %v370 = vld [vmem:[%s314 + $0x18] sm:$0xff]
        %v371 = vld [vmem:[%s314 + $0x20] sm:$0xff]
        %v372 = vld [vmem:[%s314 + $0x28] sm:$0xff]
        %v373 = vld [vmem:[%s314 + $0x30] sm:$0xff]
        %v374 = vld [vmem:[%s314 + $0x38] sm:$0xff]
        %v375 = vld [vmem:[%s314 + $0x40] sm:$0xff]
        %v376 = vld [vmem:[%s314 + $0x48] sm:$0xff]
        %v377 = vld [vmem:[%s314 + $0x50] sm:$0xff]
        %v378 = vld [vmem:[%s314 + $0x58] sm:$0xff]
        %v379 = vld [vmem:[%s314 + $0x60] sm:$0xff]
        %v380 = vld [vmem:[%s314 + $0x68] sm:$0xff]
        %v381 = vld [vmem:[%s314 + $0x70] sm:$0xff]
        %v382 = vld [vmem:[%s314 + $0x78] sm:$0xff]
        %v383 = vld [vmem:[%s314 + $0x80] sm:$0xff]
        %v384 = vld [vmem:[%s314 + $0x88] sm:$0xff]
        %v385 = vld [vmem:[%s314 + $0x90] sm:$0xff]
        %v386 = vld [vmem:[%s314 + $0x98] sm:$0xff]
        %v387 = vld [vmem:[%s314 + $0xa0] sm:$0xff]
        %v388 = vld [vmem:[%s314 + $0xa8] sm:$0xff]
        %v389 = vld [vmem:[%s314 + $0xb0] sm:$0xff]
        %v390 = vld [vmem:[%s314 + $0xb8] sm:$0xff]
        %v391 = vld [vmem:[%s314 + $0xc0] sm:$0xff]
        %v392 = vld [vmem:[%s314 + $0xc8] sm:$0xff]
        %v393 = vld [vmem:[%s314 + $0xd0] sm:$0xff]
        %v394 = vld [vmem:[%s314 + $0xd8] sm:$0xff]
        %v395 = vld [vmem:[%s314 + $0xe0] sm:$0xff]
        %v396 = vld [vmem:[%s314 + $0xe8] sm:$0xff]
        %v397 = vld [vmem:[%s314 + $0xf0] sm:$0xff]
        %v398 = vld [vmem:[%s314 + $0xf8] sm:$0xff]
        %v399 = vld [vmem:[%s323] sm:$0xff]
        %v400 = vld [vmem:[%s323 + $0x8] sm:$0xff]
        %v401 = vld [vmem:[%s323 + $0x10] sm:$0xff]
        %v402 = vld [vmem:[%s323 + $0x18] sm:$0xff]
        %v403 = vld [vmem:[%s323 + $0x20] sm:$0xff]
        %v404 = vld [vmem:[%s323 + $0x28] sm:$0xff]
        %v405 = vld [vmem:[%s323 + $0x30] sm:$0xff]
        %v406 = vld [vmem:[%s323 + $0x38] sm:$0xff]
        %v407 = vld [vmem:[%s323 + $0x40] sm:$0xff]
        %v408 = vld [vmem:[%s323 + $0x48] sm:$0xff]
        %v409 = vld [vmem:[%s323 + $0x50] sm:$0xff]
        %v410 = vld [vmem:[%s323 + $0x58] sm:$0xff]
        %v411 = vld [vmem:[%s323 + $0x60] sm:$0xff]
        %v412 = vld [vmem:[%s323 + $0x68] sm:$0xff]
        %v413 = vld [vmem:[%s323 + $0x70] sm:$0xff]
        %v414 = vld [vmem:[%s323 + $0x78] sm:$0xff]
        %v415 = vld [vmem:[%s365] sm:$0x1]
        %v417 = vlaneseq
        %v418 = vshrl.u32 %v417, 7
        %v419 = vsub.s32 0, %v418
        %v420 = vrot.slane %v415, %v419
        %422 = vmatprep.subr.mxu0 0.0
        %423 = vmatpush1.msra.mxu0 %v414
        %424 = vmatprep.subr.mxu0 0.0
        %425 = vmatpush1.msra.mxu0 %v413
        %426 = vmatprep.subr.mxu0 0.0
        %427 = vmatpush1.msra.mxu0 %v412
        %428 = vmatprep.subr.mxu0 0.0
        %429 = vmatpush1.msra.mxu0 %v411
        %430 = vmatprep.subr.mxu0 0.0
        %431 = vmatpush1.msra.mxu0 %v410
        %432 = vmatprep.subr.mxu0 0.0
        %433 = vmatpush1.msra.mxu0 %v409
        %434 = vmatprep.subr.mxu0 0.0
        %435 = vmatpush1.msra.mxu0 %v408
        %436 = vmatprep.subr.mxu0 0.0
        %437 = vmatpush1.msra.mxu0 %v407
        %438 = vmatprep.subr.mxu0 0.0
        %439 = vmatpush1.msra.mxu0 %v406
        %440 = vmatprep.subr.mxu0 0.0
        %441 = vmatpush1.msra.mxu0 %v405
        %442 = vmatprep.subr.mxu0 0.0
        %443 = vmatpush1.msra.mxu0 %v404
        %444 = vmatprep.subr.mxu0 0.0
        %445 = vmatpush1.msra.mxu0 %v403
        %446 = vmatprep.subr.mxu0 0.0
        %447 = vmatpush1.msra.mxu0 %v402
        %448 = vmatprep.subr.mxu0 0.0
        %449 = vmatpush1.msra.mxu0 %v401
        %450 = vmatprep.subr.mxu0 0.0
        %451 = vmatpush1.msra.mxu0 %v400
        %452 = vmatprep.subr.mxu0 0.0
        %453 = vmatpush1.msra.mxu0 %v399
        %454 = vmatprep.subr.mxu0 0.0
        %455 = vmatpush2.msra.mxu0 0.0
        %456 = vmatprep.subr.mxu0 0.0
        %457 = vmatpush2.msra.mxu0 0.0
        %458 = vmatprep.subr.mxu0 0.0
        %459 = vmatpush2.msra.mxu0 0.0
        %460 = vmatprep.subr.mxu0 0.0
        %461 = vmatpush2.msra.mxu0 0.0
        %462 = vmatprep.subr.mxu0 0.0
        %463 = vmatpush2.msra.mxu0 0.0
        %464 = vmatprep.subr.mxu0 0.0
        %465 = vmatpush2.msra.mxu0 0.0
        %466 = vmatprep.subr.mxu0 0.0
        %467 = vmatpush2.msra.mxu0 0.0
        %468 = vmatprep.subr.mxu0 0.0
        %469 = vmatpush2.msra.mxu0 0.0
        %470 = vmatprep.subr.mxu0 0.0
        %471 = vmatpush2.msra.mxu0 0.0
        %472 = vmatprep.subr.mxu0 0.0
        %473 = vmatpush2.msra.mxu0 0.0
        %474 = vmatprep.subr.mxu0 0.0
        %475 = vmatpush2.msra.mxu0 0.0
        %476 = vmatprep.subr.mxu0 0.0
        %477 = vmatpush2.msra.mxu0 0.0
        %478 = vmatprep.subr.mxu0 0.0
        %479 = vmatpush2.msra.mxu0 0.0
        %480 = vmatprep.subr.mxu0 0.0
        %481 = vmatpush2.msra.mxu0 0.0
        %482 = vmatprep.subr.mxu0 0.0
        %483 = vmatpush2.msra.mxu0 0.0
        %484 = vmatprep.subr.mxu0 0.0
        %485 = vmatpush2.msra.mxu0 0.0
        %486 = vmatprep.mubr.f32.mxu0 0.0
        %487 = vmatmul.mubr.f32.gmra.mxu0 %v367
        %v488 = vpop.f32.mrf.mxu0
        %v489 = vadd.f32 %v420, %v488
        %v490 = vpop.f32.mrf.mxu0
        %491 = vmatprep.mubr.f32.mxu0 0.0
        %492 = vmatmul.mubr.f32.gmra.mxu0 %v368
        %v493 = vpop.f32.mrf.mxu0
        %v494 = vadd.f32 %v420, %v493
        %v495 = vpop.f32.mrf.mxu0
        %496 = vmatprep.mubr.f32.mxu0 0.0
        %497 = vmatmul.mubr.f32.gmra.mxu0 %v369
        %v498 = vpop.f32.mrf.mxu0
        %v499 = vadd.f32 %v420, %v498
        %v500 = vpop.f32.mrf.mxu0
        %501 = vmatprep.mubr.f32.mxu0 0.0
        %502 = vmatmul.mubr.f32.gmra.mxu0 %v370
        %v503 = vpop.f32.mrf.mxu0
        %v504 = vadd.f32 %v420, %v503
        %v505 = vpop.f32.mrf.mxu0
        %506 = vmatprep.mubr.f32.mxu0 0.0
        %507 = vmatmul.mubr.f32.gmra.mxu0 %v371
        %v508 = vpop.f32.mrf.mxu0
        %v509 = vadd.f32 %v420, %v508
        %v510 = vpop.f32.mrf.mxu0
        %511 = vmatprep.mubr.f32.mxu0 0.0
        %512 = vmatmul.mubr.f32.gmra.mxu0 %v372
        %v513 = vpop.f32.mrf.mxu0
        %v514 = vadd.f32 %v420, %v513
        %v515 = vpop.f32.mrf.mxu0
        %516 = vmatprep.mubr.f32.mxu0 0.0
        %517 = vmatmul.mubr.f32.gmra.mxu0 %v373
        %v518 = vpop.f32.mrf.mxu0
        %v519 = vadd.f32 %v420, %v518
        %v520 = vpop.f32.mrf.mxu0
        %521 = vmatprep.mubr.f32.mxu0 0.0
        %522 = vmatmul.mubr.f32.gmra.mxu0 %v374
        %v523 = vpop.f32.mrf.mxu0
        %v524 = vadd.f32 %v420, %v523
        %v525 = vpop.f32.mrf.mxu0
        %526 = vmatprep.mubr.f32.mxu0 0.0
        %527 = vmatmul.mubr.f32.gmra.mxu0 %v375
        %v528 = vpop.f32.mrf.mxu0
        %v529 = vadd.f32 %v420, %v528
        %v530 = vpop.f32.mrf.mxu0
        %531 = vmatprep.mubr.f32.mxu0 0.0
        %532 = vmatmul.mubr.f32.gmra.mxu0 %v376
        %v533 = vpop.f32.mrf.mxu0
        %v534 = vadd.f32 %v420, %v533
        %v535 = vpop.f32.mrf.mxu0
        %536 = vmatprep.mubr.f32.mxu0 0.0
        %537 = vmatmul.mubr.f32.gmra.mxu0 %v377
        %v538 = vpop.f32.mrf.mxu0
        %v539 = vadd.f32 %v420, %v538
        %v540 = vpop.f32.mrf.mxu0
        %541 = vmatprep.mubr.f32.mxu0 0.0
        %542 = vmatmul.mubr.f32.gmra.mxu0 %v378
        %v543 = vpop.f32.mrf.mxu0
        %v544 = vadd.f32 %v420, %v543
        %v545 = vpop.f32.mrf.mxu0
        %546 = vmatprep.mubr.f32.mxu0 0.0
        %547 = vmatmul.mubr.f32.gmra.mxu0 %v379
        %v548 = vpop.f32.mrf.mxu0
        %v549 = vadd.f32 %v420, %v548
        %v550 = vpop.f32.mrf.mxu0
        %551 = vmatprep.mubr.f32.mxu0 0.0
        %552 = vmatmul.mubr.f32.gmra.mxu0 %v380
        %v553 = vpop.f32.mrf.mxu0
        %v554 = vadd.f32 %v420, %v553
        %v555 = vpop.f32.mrf.mxu0
        %556 = vmatprep.mubr.f32.mxu0 0.0
        %557 = vmatmul.mubr.f32.gmra.mxu0 %v381
        %v558 = vpop.f32.mrf.mxu0
        %v559 = vadd.f32 %v420, %v558
        %v560 = vpop.f32.mrf.mxu0
        %561 = vmatprep.mubr.f32.mxu0 0.0
        %562 = vmatmul.mubr.f32.gmra.mxu0 %v382
        %v563 = vpop.f32.mrf.mxu0
        %v564 = vadd.f32 %v420, %v563
        %v565 = vpop.f32.mrf.mxu0
        %566 = vmatprep.mubr.f32.mxu0 0.0
        %567 = vmatmul.mubr.f32.gmra.mxu0 %v383
        %v568 = vpop.f32.mrf.mxu0
        %v569 = vadd.f32 %v420, %v568
        %v570 = vpop.f32.mrf.mxu0
        %571 = vmatprep.mubr.f32.mxu0 0.0
        %572 = vmatmul.mubr.f32.gmra.mxu0 %v384
        %v573 = vpop.f32.mrf.mxu0
        %v574 = vadd.f32 %v420, %v573
        %v575 = vpop.f32.mrf.mxu0
        %576 = vmatprep.mubr.f32.mxu0 0.0
        %577 = vmatmul.mubr.f32.gmra.mxu0 %v385
        %v578 = vpop.f32.mrf.mxu0
        %v579 = vadd.f32 %v420, %v578
        %v580 = vpop.f32.mrf.mxu0
        %581 = vmatprep.mubr.f32.mxu0 0.0
        %582 = vmatmul.mubr.f32.gmra.mxu0 %v386
        %v583 = vpop.f32.mrf.mxu0
        %v584 = vadd.f32 %v420, %v583
        %v585 = vpop.f32.mrf.mxu0
        %586 = vmatprep.mubr.f32.mxu0 0.0
        %587 = vmatmul.mubr.f32.gmra.mxu0 %v387
        %v588 = vpop.f32.mrf.mxu0
        %v589 = vadd.f32 %v420, %v588
        %v590 = vpop.f32.mrf.mxu0
        %591 = vmatprep.mubr.f32.mxu0 0.0
        %592 = vmatmul.mubr.f32.gmra.mxu0 %v388
        %v593 = vpop.f32.mrf.mxu0
        %v594 = vadd.f32 %v420, %v593
        %v595 = vpop.f32.mrf.mxu0
        %596 = vmatprep.mubr.f32.mxu0 0.0
        %597 = vmatmul.mubr.f32.gmra.mxu0 %v389
        %v598 = vpop.f32.mrf.mxu0
        %v599 = vadd.f32 %v420, %v598
        %v600 = vpop.f32.mrf.mxu0
        %601 = vmatprep.mubr.f32.mxu0 0.0
        %602 = vmatmul.mubr.f32.gmra.mxu0 %v390
        %v603 = vpop.f32.mrf.mxu0
        %v604 = vadd.f32 %v420, %v603
        %v605 = vpop.f32.mrf.mxu0
        %606 = vmatprep.mubr.f32.mxu0 0.0
        %607 = vmatmul.mubr.f32.gmra.mxu0 %v391
        %v608 = vpop.f32.mrf.mxu0
        %v609 = vadd.f32 %v420, %v608
        %v610 = vpop.f32.mrf.mxu0
        %611 = vmatprep.mubr.f32.mxu0 0.0
        %612 = vmatmul.mubr.f32.gmra.mxu0 %v392
        %v613 = vpop.f32.mrf.mxu0
        %v614 = vadd.f32 %v420, %v613
        %v615 = vpop.f32.mrf.mxu0
        %616 = vmatprep.mubr.f32.mxu0 0.0
        %617 = vmatmul.mubr.f32.gmra.mxu0 %v393
        %v618 = vpop.f32.mrf.mxu0
        %v619 = vadd.f32 %v420, %v618
        %v620 = vpop.f32.mrf.mxu0
        %621 = vmatprep.mubr.f32.mxu0 0.0
        %622 = vmatmul.mubr.f32.gmra.mxu0 %v394
        %v623 = vpop.f32.mrf.mxu0
        %v624 = vadd.f32 %v420, %v623
        %v625 = vpop.f32.mrf.mxu0
        %626 = vmatprep.mubr.f32.mxu0 0.0
        %627 = vmatmul.mubr.f32.gmra.mxu0 %v395
        %v628 = vpop.f32.mrf.mxu0
        %v629 = vadd.f32 %v420, %v628
        %v630 = vpop.f32.mrf.mxu0
        %631 = vmatprep.mubr.f32.mxu0 0.0
        %632 = vmatmul.mubr.f32.gmra.mxu0 %v396
        %v633 = vpop.f32.mrf.mxu0
        %v634 = vadd.f32 %v420, %v633
        %v635 = vpop.f32.mrf.mxu0
        %636 = vmatprep.mubr.f32.mxu0 0.0
        %637 = vmatmul.mubr.f32.gmra.mxu0 %v397
        %v638 = vpop.f32.mrf.mxu0
        %v639 = vadd.f32 %v420, %v638
        %v640 = vpop.f32.mrf.mxu0
        %641 = vmatprep.mubr.f32.mxu0 0.0
        %642 = vmatmul.mubr.f32.gmra.mxu0 %v398
        %v643 = vpop.f32.mrf.mxu0
        %v644 = vadd.f32 %v420, %v643
        %v645 = vpop.f32.mrf.mxu0
        %646 = vdwg.mxu0
        %p647 = scmp.eq.s32.totalorder %s31, 0
        // Predicated region
        $region57: #{tpu_custom_call.1} parent=47 // pred_check
          %p648 = pneg %p647
        $region58: #{tpu_custom_call.1} parent=47 // pred_check_branch
          %650 = sbr.rel (%p648) target = $region60
        $region59: #{tpu_custom_call.1} parent=47 // pred_region
          %v651 = vld [vmem:[%s3] sm:$0xff]
          %v652 = vld [vmem:[%s3 + $0x8] sm:$0xff]
          %v653 = vld [vmem:[%s3 + $0x10] sm:$0xff]
          %v654 = vld [vmem:[%s3 + $0x18] sm:$0xff]
          %v655 = vld [vmem:[%s3 + $0x20] sm:$0xff]
          %v656 = vld [vmem:[%s3 + $0x28] sm:$0xff]
          %v657 = vld [vmem:[%s3 + $0x30] sm:$0xff]
          %v658 = vld [vmem:[%s3 + $0x38] sm:$0xff]
          %v659 = vld [vmem:[%s3 + $0x40] sm:$0xff]
          %v660 = vld [vmem:[%s3 + $0x48] sm:$0xff]
          %v661 = vld [vmem:[%s3 + $0x50] sm:$0xff]
          %v662 = vld [vmem:[%s3 + $0x58] sm:$0xff]
          %v663 = vld [vmem:[%s3 + $0x60] sm:$0xff]
          %v664 = vld [vmem:[%s3 + $0x68] sm:$0xff]
          %v665 = vld [vmem:[%s3 + $0x70] sm:$0xff]
          %v666 = vld [vmem:[%s3 + $0x78] sm:$0xff]
          %667 = vmatprep.subr.mxu0 0.0
          %668 = vmatpush1.msra.mxu0 %v666
          %669 = vmatprep.subr.mxu0 0.0
          %670 = vmatpush1.msra.mxu0 %v665
          %671 = vmatprep.subr.mxu0 0.0
          %672 = vmatpush1.msra.mxu0 %v664
          %673 = vmatprep.subr.mxu0 0.0
          %674 = vmatpush1.msra.mxu0 %v663
          %675 = vmatprep.subr.mxu0 0.0
          %676 = vmatpush1.msra.mxu0 %v662
          %677 = vmatprep.subr.mxu0 0.0
          %678 = vmatpush1.msra.mxu0 %v661
          %679 = vmatprep.subr.mxu0 0.0
          %680 = vmatpush1.msra.mxu0 %v660
          %681 = vmatprep.subr.mxu0 0.0
          %682 = vmatpush1.msra.mxu0 %v659
          %683 = vmatprep.subr.mxu0 0.0
          %684 = vmatpush1.msra.mxu0 %v658
          %685 = vmatprep.subr.mxu0 0.0
          %686 = vmatpush1.msra.mxu0 %v657
          %687 = vmatprep.subr.mxu0 0.0
          %688 = vmatpush1.msra.mxu0 %v656
          %689 = vmatprep.subr.mxu0 0.0
          %690 = vmatpush1.msra.mxu0 %v655
          %691 = vmatprep.subr.mxu0 0.0
          %692 = vmatpush1.msra.mxu0 %v654
          %693 = vmatprep.subr.mxu0 0.0
          %694 = vmatpush1.msra.mxu0 %v653
          %695 = vmatprep.subr.mxu0 0.0
          %696 = vmatpush1.msra.mxu0 %v652
          %697 = vmatprep.subr.mxu0 0.0
          %698 = vmatpush1.msra.mxu0 %v651
          %699 = vmatprep.subr.mxu0 0.0
          %700 = vmatpush2.msra.mxu0 0.0
          %701 = vmatprep.subr.mxu0 0.0
          %702 = vmatpush2.msra.mxu0 0.0
          %703 = vmatprep.subr.mxu0 0.0
          %704 = vmatpush2.msra.mxu0 0.0
          %705 = vmatprep.subr.mxu0 0.0
          %706 = vmatpush2.msra.mxu0 0.0
          %707 = vmatprep.subr.mxu0 0.0
          %708 = vmatpush2.msra.mxu0 0.0
          %709 = vmatprep.subr.mxu0 0.0
          %710 = vmatpush2.msra.mxu0 0.0
          %711 = vmatprep.subr.mxu0 0.0
          %712 = vmatpush2.msra.mxu0 0.0
          %713 = vmatprep.subr.mxu0 0.0
          %714 = vmatpush2.msra.mxu0 0.0
          %715 = vmatprep.subr.mxu0 0.0
          %716 = vmatpush2.msra.mxu0 0.0
          %717 = vmatprep.subr.mxu0 0.0
          %718 = vmatpush2.msra.mxu0 0.0
          %719 = vmatprep.subr.mxu0 0.0
          %720 = vmatpush2.msra.mxu0 0.0
          %721 = vmatprep.subr.mxu0 0.0
          %722 = vmatpush2.msra.mxu0 0.0
          %723 = vmatprep.subr.mxu0 0.0
          %724 = vmatpush2.msra.mxu0 0.0
          %725 = vmatprep.subr.mxu0 0.0
          %726 = vmatpush2.msra.mxu0 0.0
          %727 = vmatprep.subr.mxu0 0.0
          %728 = vmatpush2.msra.mxu0 0.0
          %729 = vmatprep.subr.mxu0 0.0
          %730 = vmatpush2.msra.mxu0 0.0
          %731 = vmatprep.mubr.f32.mxu0 0.0
          %732 = vmatmul.mubr.f32.gmra.mxu0 %v367
          %v733 = vpop.f32.mrf.mxu0
          %v734 = vadd.f32 0.0, %v733
          %v735 = vpop.f32.mrf.mxu0
          %736 = vmatprep.mubr.f32.mxu0 0.0
          %737 = vmatmul.mubr.f32.gmra.mxu0 %v368
          %v738 = vpop.f32.mrf.mxu0
          %v739 = vadd.f32 0.0, %v738
          %v740 = vpop.f32.mrf.mxu0
          %741 = vmatprep.mubr.f32.mxu0 0.0
          %742 = vmatmul.mubr.f32.gmra.mxu0 %v369
          %v743 = vpop.f32.mrf.mxu0
          %v744 = vadd.f32 0.0, %v743
          %v745 = vpop.f32.mrf.mxu0
          %746 = vmatprep.mubr.f32.mxu0 0.0
          %747 = vmatmul.mubr.f32.gmra.mxu0 %v370
          %v748 = vpop.f32.mrf.mxu0
          %v749 = vadd.f32 0.0, %v748
          %v750 = vpop.f32.mrf.mxu0
          %751 = vmatprep.mubr.f32.mxu0 0.0
          %752 = vmatmul.mubr.f32.gmra.mxu0 %v371
          %v753 = vpop.f32.mrf.mxu0
          %v754 = vadd.f32 0.0, %v753
          %v755 = vpop.f32.mrf.mxu0
          %756 = vmatprep.mubr.f32.mxu0 0.0
          %757 = vmatmul.mubr.f32.gmra.mxu0 %v372
          %v758 = vpop.f32.mrf.mxu0
          %v759 = vadd.f32 0.0, %v758
          %v760 = vpop.f32.mrf.mxu0
          %761 = vmatprep.mubr.f32.mxu0 0.0
          %762 = vmatmul.mubr.f32.gmra.mxu0 %v373
          %v763 = vpop.f32.mrf.mxu0
          %v764 = vadd.f32 0.0, %v763
          %v765 = vpop.f32.mrf.mxu0
          %766 = vmatprep.mubr.f32.mxu0 0.0
          %767 = vmatmul.mubr.f32.gmra.mxu0 %v374
          %v768 = vpop.f32.mrf.mxu0
          %v769 = vadd.f32 0.0, %v768
          %v770 = vpop.f32.mrf.mxu0
          %771 = vmatprep.mubr.f32.mxu0 0.0
          %772 = vmatmul.mubr.f32.gmra.mxu0 %v375
          %v773 = vpop.f32.mrf.mxu0
          %v774 = vadd.f32 0.0, %v773
          %v775 = vpop.f32.mrf.mxu0
          %776 = vmatprep.mubr.f32.mxu0 0.0
          %777 = vmatmul.mubr.f32.gmra.mxu0 %v376
          %v778 = vpop.f32.mrf.mxu0
          %v779 = vadd.f32 0.0, %v778
          %v780 = vpop.f32.mrf.mxu0
          %781 = vmatprep.mubr.f32.mxu0 0.0
          %782 = vmatmul.mubr.f32.gmra.mxu0 %v377
          %v783 = vpop.f32.mrf.mxu0
          %v784 = vadd.f32 0.0, %v783
          %v785 = vpop.f32.mrf.mxu0
          %786 = vmatprep.mubr.f32.mxu0 0.0
          %787 = vmatmul.mubr.f32.gmra.mxu0 %v378
          %v788 = vpop.f32.mrf.mxu0
          %v789 = vadd.f32 0.0, %v788
          %v790 = vpop.f32.mrf.mxu0
          %791 = vmatprep.mubr.f32.mxu0 0.0
          %792 = vmatmul.mubr.f32.gmra.mxu0 %v379
          %v793 = vpop.f32.mrf.mxu0
          %v794 = vadd.f32 0.0, %v793
          %v795 = vpop.f32.mrf.mxu0
          %796 = vmatprep.mubr.f32.mxu0 0.0
          %797 = vmatmul.mubr.f32.gmra.mxu0 %v380
          %v798 = vpop.f32.mrf.mxu0
          %v799 = vadd.f32 0.0, %v798
          %v800 = vpop.f32.mrf.mxu0
          %801 = vmatprep.mubr.f32.mxu0 0.0
          %802 = vmatmul.mubr.f32.gmra.mxu0 %v381
          %v803 = vpop.f32.mrf.mxu0
          %v804 = vadd.f32 0.0, %v803
          %v805 = vpop.f32.mrf.mxu0
          %806 = vmatprep.mubr.f32.mxu0 0.0
          %807 = vmatmul.mubr.f32.gmra.mxu0 %v382
          %v808 = vpop.f32.mrf.mxu0
          %v809 = vadd.f32 0.0, %v808
          %v810 = vpop.f32.mrf.mxu0
          %811 = vmatprep.mubr.f32.mxu0 0.0
          %812 = vmatmul.mubr.f32.gmra.mxu0 %v383
          %v813 = vpop.f32.mrf.mxu0
          %v814 = vadd.f32 0.0, %v813
          %v815 = vpop.f32.mrf.mxu0
          %816 = vmatprep.mubr.f32.mxu0 0.0
          %817 = vmatmul.mubr.f32.gmra.mxu0 %v384
          %v818 = vpop.f32.mrf.mxu0
          %v819 = vadd.f32 0.0, %v818
          %v820 = vpop.f32.mrf.mxu0
          %821 = vmatprep.mubr.f32.mxu0 0.0
          %822 = vmatmul.mubr.f32.gmra.mxu0 %v385
          %v823 = vpop.f32.mrf.mxu0
          %v824 = vadd.f32 0.0, %v823
          %v825 = vpop.f32.mrf.mxu0
          %826 = vmatprep.mubr.f32.mxu0 0.0
          %827 = vmatmul.mubr.f32.gmra.mxu0 %v386
          %v828 = vpop.f32.mrf.mxu0
          %v829 = vadd.f32 0.0, %v828
          %v830 = vpop.f32.mrf.mxu0
          %831 = vmatprep.mubr.f32.mxu0 0.0
          %832 = vmatmul.mubr.f32.gmra.mxu0 %v387
          %v833 = vpop.f32.mrf.mxu0
          %v834 = vadd.f32 0.0, %v833
          %v835 = vpop.f32.mrf.mxu0
          %836 = vmatprep.mubr.f32.mxu0 0.0
          %837 = vmatmul.mubr.f32.gmra.mxu0 %v388
          %v838 = vpop.f32.mrf.mxu0
          %v839 = vadd.f32 0.0, %v838
          %v840 = vpop.f32.mrf.mxu0
          %841 = vmatprep.mubr.f32.mxu0 0.0
          %842 = vmatmul.mubr.f32.gmra.mxu0 %v389
          %v843 = vpop.f32.mrf.mxu0
          %v844 = vadd.f32 0.0, %v843
          %v845 = vpop.f32.mrf.mxu0
          %846 = vmatprep.mubr.f32.mxu0 0.0
          %847 = vmatmul.mubr.f32.gmra.mxu0 %v390
          %v848 = vpop.f32.mrf.mxu0
          %v849 = vadd.f32 0.0, %v848
          %v850 = vpop.f32.mrf.mxu0
          %851 = vmatprep.mubr.f32.mxu0 0.0
          %852 = vmatmul.mubr.f32.gmra.mxu0 %v391
          %v853 = vpop.f32.mrf.mxu0
          %v854 = vadd.f32 0.0, %v853
          %v855 = vpop.f32.mrf.mxu0
          %856 = vmatprep.mubr.f32.mxu0 0.0
          %857 = vmatmul.mubr.f32.gmra.mxu0 %v392
          %v858 = vpop.f32.mrf.mxu0
          %v859 = vadd.f32 0.0, %v858
          %v860 = vpop.f32.mrf.mxu0
          %861 = vmatprep.mubr.f32.mxu0 0.0
          %862 = vmatmul.mubr.f32.gmra.mxu0 %v393
          %v863 = vpop.f32.mrf.mxu0
          %v864 = vadd.f32 0.0, %v863
          %v865 = vpop.f32.mrf.mxu0
          %866 = vmatprep.mubr.f32.mxu0 0.0
          %867 = vmatmul.mubr.f32.gmra.mxu0 %v394
          %v868 = vpop.f32.mrf.mxu0
          %v869 = vadd.f32 0.0, %v868
          %v870 = vpop.f32.mrf.mxu0
          %871 = vmatprep.mubr.f32.mxu0 0.0
          %872 = vmatmul.mubr.f32.gmra.mxu0 %v395
          %v873 = vpop.f32.mrf.mxu0
          %v874 = vadd.f32 0.0, %v873
          %v875 = vpop.f32.mrf.mxu0
          %876 = vmatprep.mubr.f32.mxu0 0.0
          %877 = vmatmul.mubr.f32.gmra.mxu0 %v396
          %v878 = vpop.f32.mrf.mxu0
          %v879 = vadd.f32 0.0, %v878
          %v880 = vpop.f32.mrf.mxu0
          %881 = vmatprep.mubr.f32.mxu0 0.0
          %882 = vmatmul.mubr.f32.gmra.mxu0 %v397
          %v883 = vpop.f32.mrf.mxu0
          %v884 = vadd.f32 0.0, %v883
          %v885 = vpop.f32.mrf.mxu0
          %886 = vmatprep.mubr.f32.mxu0 0.0
          %887 = vmatmul.mubr.f32.gmra.mxu0 %v398
          %v888 = vpop.f32.mrf.mxu0
          %v889 = vadd.f32 0.0, %v888
          %v890 = vpop.f32.mrf.mxu0
          %891 = vdwg.mxu0
          %v892 = vld [vmem:[%s5] sm:$0xf]
          %vm893 = vcmask 31744
          %v895 = vsel %vm893, %v734, 0
          %v898 = vsel %vm893, %v739, 0
          %v901 = vsel %vm893, %v744, 0
          %v904 = vsel %vm893, %v749, 0
          %v907 = vsel %vm893, %v754, 0
          %v910 = vsel %vm893, %v759, 0
          %v913 = vsel %vm893, %v764, 0
          %v916 = vsel %vm893, %v769, 0
          %v919 = vsel %vm893, %v774, 0
          %v922 = vsel %vm893, %v779, 0
          %v925 = vsel %vm893, %v784, 0
          %v928 = vsel %vm893, %v789, 0
          %v931 = vsel %vm893, %v794, 0
          %v934 = vsel %vm893, %v799, 0
          %v937 = vsel %vm893, %v804, 0
          %v940 = vsel %vm893, %v809, 0
          %v943 = vsel %vm893, %v814, 0
          %v946 = vsel %vm893, %v819, 0
          %v949 = vsel %vm893, %v824, 0
          %v952 = vsel %vm893, %v829, 0
          %v955 = vsel %vm893, %v834, 0
          %v958 = vsel %vm893, %v839, 0
          %v961 = vsel %vm893, %v844, 0
          %v964 = vsel %vm893, %v849, 0
          %v967 = vsel %vm893, %v854, 0
          %v970 = vsel %vm893, %v859, 0
          %v973 = vsel %vm893, %v864, 0
          %v976 = vsel %vm893, %v869, 0
          %v979 = vsel %vm893, %v874, 0
          %v982 = vsel %vm893, %v879, 0
          %v985 = vsel %vm893, %v884, 0
          %v988 = vsel %vm893, %v889, 0
          %vm990 = vcmask 1043456
          %v992 = vsel %vm990, %v892, 0
          %994 = vmatprep.subr.mxu0 0.0
          %995 = vmatpush1.msra.mxu0 0.0
          %996 = vmatprep.subr.mxu0 0.0
          %997 = vmatpush1.msra.mxu0 0.0
          %998 = vmatprep.subr.mxu0 0.0
          %999 = vmatpush1.msra.mxu0 0.0
          %1000 = vmatprep.subr.mxu0 0.0
          %1001 = vmatpush1.msra.mxu0 0.0
          %1002 = vmatprep.subr.mxu0 0.0
          %1003 = vmatpush1.msra.mxu0 0.0
          %1004 = vmatprep.subr.mxu0 0.0
          %1005 = vmatpush1.msra.mxu0 0.0
          %1006 = vmatprep.subr.mxu0 0.0
          %1007 = vmatpush1.msra.mxu0 0.0
          %1008 = vmatprep.subr.mxu0 0.0
          %1009 = vmatpush1.msra.mxu0 0.0
          %1010 = vmatprep.subr.mxu0 0.0
          %1011 = vmatpush1.msra.mxu0 0.0
          %1012 = vmatprep.subr.mxu0 0.0
          %1013 = vmatpush1.msra.mxu0 0.0
          %1014 = vmatprep.subr.mxu0 0.0
          %1015 = vmatpush1.msra.mxu0 0.0
          %1016 = vmatprep.subr.mxu0 0.0
          %1017 = vmatpush1.msra.mxu0 0.0
          %1018 = vmatprep.subr.mxu0 0.0
          %1019 = vmatpush1.msra.mxu0 0.0
          %1020 = vmatprep.subr.mxu0 0.0
          %1021 = vmatpush1.msra.mxu0 0.0
          %1022 = vmatprep.subr.mxu0 0.0
          %1023 = vmatpush1.msra.mxu0 0.0
          %1024 = vmatprep.subr.mxu0 0.0
          %1025 = vmatpush1.msra.mxu0 %v992
          %1026 = vmatprep.subr.mxu0 0.0
          %1027 = vmatpush2.msra.mxu0 0.0
          %1028 = vmatprep.subr.mxu0 0.0
          %1029 = vmatpush2.msra.mxu0 0.0
          %1030 = vmatprep.subr.mxu0 0.0
          %1031 = vmatpush2.msra.mxu0 0.0
          %1032 = vmatprep.subr.mxu0 0.0
          %1033 = vmatpush2.msra.mxu0 0.0
          %1034 = vmatprep.subr.mxu0 0.0
          %1035 = vmatpush2.msra.mxu0 0.0
          %1036 = vmatprep.subr.mxu0 0.0
          %1037 = vmatpush2.msra.mxu0 0.0
          %1038 = vmatprep.subr.mxu0 0.0
          %1039 = vmatpush2.msra.mxu0 0.0
          %1040 = vmatprep.subr.mxu0 0.0
          %1041 = vmatpush2.msra.mxu0 0.0
          %1042 = vmatprep.subr.mxu0 0.0
          %1043 = vmatpush2.msra.mxu0 0.0
          %1044 = vmatprep.subr.mxu0 0.0
          %1045 = vmatpush2.msra.mxu0 0.0
          %1046 = vmatprep.subr.mxu0 0.0
          %1047 = vmatpush2.msra.mxu0 0.0
          %1048 = vmatprep.subr.mxu0 0.0
          %1049 = vmatpush2.msra.mxu0 0.0
          %1050 = vmatprep.subr.mxu0 0.0
          %1051 = vmatpush2.msra.mxu0 0.0
          %1052 = vmatprep.subr.mxu0 0.0
          %1053 = vmatpush2.msra.mxu0 0.0
          %1054 = vmatprep.subr.mxu0 0.0
          %1055 = vmatpush2.msra.mxu0 0.0
          %1056 = vmatprep.subr.mxu0 0.0
          %1057 = vmatpush2.msra.mxu0 0.0
          %1058 = vmatprep.mubr.f32.mxu0 0.0
          %1059 = vmatmul.mubr.f32.gmra.mxu0 %v895
          %v1060 = vpop.f32.mrf.mxu0
          %v1061 = vadd.f32 0.0, %v1060
          %v1062 = vpop.f32.mrf.mxu0
          %1063 = vmatprep.mubr.f32.mxu0 0.0
          %1064 = vmatmul.mubr.f32.gmra.mxu0 %v898
          %v1065 = vpop.f32.mrf.mxu0
          %v1066 = vadd.f32 0.0, %v1065
          %v1067 = vpop.f32.mrf.mxu0
          %1068 = vmatprep.mubr.f32.mxu0 0.0
          %1069 = vmatmul.mubr.f32.gmra.mxu0 %v901
          %v1070 = vpop.f32.mrf.mxu0
          %v1071 = vadd.f32 0.0, %v1070
          %v1072 = vpop.f32.mrf.mxu0
          %1073 = vmatprep.mubr.f32.mxu0 0.0
          %1074 = vmatmul.mubr.f32.gmra.mxu0 %v904
          %v1075 = vpop.f32.mrf.mxu0
          %v1076 = vadd.f32 0.0, %v1075
          %v1077 = vpop.f32.mrf.mxu0
          %1078 = vmatprep.mubr.f32.mxu0 0.0
          %1079 = vmatmul.mubr.f32.gmra.mxu0 %v907
          %v1080 = vpop.f32.mrf.mxu0
          %v1081 = vadd.f32 0.0, %v1080
          %v1082 = vpop.f32.mrf.mxu0
          %1083 = vmatprep.mubr.f32.mxu0 0.0
          %1084 = vmatmul.mubr.f32.gmra.mxu0 %v910
          %v1085 = vpop.f32.mrf.mxu0
          %v1086 = vadd.f32 0.0, %v1085
          %v1087 = vpop.f32.mrf.mxu0
          %1088 = vmatprep.mubr.f32.mxu0 0.0
          %1089 = vmatmul.mubr.f32.gmra.mxu0 %v913
          %v1090 = vpop.f32.mrf.mxu0
          %v1091 = vadd.f32 0.0, %v1090
          %v1092 = vpop.f32.mrf.mxu0
          %1093 = vmatprep.mubr.f32.mxu0 0.0
          %1094 = vmatmul.mubr.f32.gmra.mxu0 %v916
          %v1095 = vpop.f32.mrf.mxu0
          %v1096 = vadd.f32 0.0, %v1095
          %v1097 = vpop.f32.mrf.mxu0
          %1098 = vmatprep.mubr.f32.mxu0 0.0
          %1099 = vmatmul.mubr.f32.gmra.mxu0 %v919
          %v1100 = vpop.f32.mrf.mxu0
          %v1101 = vadd.f32 0.0, %v1100
          %v1102 = vpop.f32.mrf.mxu0
          %1103 = vmatprep.mubr.f32.mxu0 0.0
          %1104 = vmatmul.mubr.f32.gmra.mxu0 %v922
          %v1105 = vpop.f32.mrf.mxu0
          %v1106 = vadd.f32 0.0, %v1105
          %v1107 = vpop.f32.mrf.mxu0
          %1108 = vmatprep.mubr.f32.mxu0 0.0
          %1109 = vmatmul.mubr.f32.gmra.mxu0 %v925
          %v1110 = vpop.f32.mrf.mxu0
          %v1111 = vadd.f32 0.0, %v1110
          %v1112 = vpop.f32.mrf.mxu0
          %1113 = vmatprep.mubr.f32.mxu0 0.0
          %1114 = vmatmul.mubr.f32.gmra.mxu0 %v928
          %v1115 = vpop.f32.mrf.mxu0
          %v1116 = vadd.f32 0.0, %v1115
          %v1117 = vpop.f32.mrf.mxu0
          %1118 = vmatprep.mubr.f32.mxu0 0.0
          %1119 = vmatmul.mubr.f32.gmra.mxu0 %v931
          %v1120 = vpop.f32.mrf.mxu0
          %v1121 = vadd.f32 0.0, %v1120
          %v1122 = vpop.f32.mrf.mxu0
          %1123 = vmatprep.mubr.f32.mxu0 0.0
          %1124 = vmatmul.mubr.f32.gmra.mxu0 %v934
          %v1125 = vpop.f32.mrf.mxu0
          %v1126 = vadd.f32 0.0, %v1125
          %v1127 = vpop.f32.mrf.mxu0
          %1128 = vmatprep.mubr.f32.mxu0 0.0
          %1129 = vmatmul.mubr.f32.gmra.mxu0 %v937
          %v1130 = vpop.f32.mrf.mxu0
          %v1131 = vadd.f32 0.0, %v1130
          %v1132 = vpop.f32.mrf.mxu0
          %1133 = vmatprep.mubr.f32.mxu0 0.0
          %1134 = vmatmul.mubr.f32.gmra.mxu0 %v940
          %v1135 = vpop.f32.mrf.mxu0
          %v1136 = vadd.f32 0.0, %v1135
          %v1137 = vpop.f32.mrf.mxu0
          %1138 = vmatprep.mubr.f32.mxu0 0.0
          %1139 = vmatmul.mubr.f32.gmra.mxu0 %v943
          %v1140 = vpop.f32.mrf.mxu0
          %v1141 = vadd.f32 0.0, %v1140
          %v1142 = vpop.f32.mrf.mxu0
          %1143 = vmatprep.mubr.f32.mxu0 0.0
          %1144 = vmatmul.mubr.f32.gmra.mxu0 %v946
          %v1145 = vpop.f32.mrf.mxu0
          %v1146 = vadd.f32 0.0, %v1145
          %v1147 = vpop.f32.mrf.mxu0
          %1148 = vmatprep.mubr.f32.mxu0 0.0
          %1149 = vmatmul.mubr.f32.gmra.mxu0 %v949
          %v1150 = vpop.f32.mrf.mxu0
          %v1151 = vadd.f32 0.0, %v1150
          %v1152 = vpop.f32.mrf.mxu0
          %1153 = vmatprep.mubr.f32.mxu0 0.0
          %1154 = vmatmul.mubr.f32.gmra.mxu0 %v952
          %v1155 = vpop.f32.mrf.mxu0
          %v1156 = vadd.f32 0.0, %v1155
          %v1157 = vpop.f32.mrf.mxu0
          %1158 = vmatprep.mubr.f32.mxu0 0.0
          %1159 = vmatmul.mubr.f32.gmra.mxu0 %v955
          %v1160 = vpop.f32.mrf.mxu0
          %v1161 = vadd.f32 0.0, %v1160
          %v1162 = vpop.f32.mrf.mxu0
          %1163 = vmatprep.mubr.f32.mxu0 0.0
          %1164 = vmatmul.mubr.f32.gmra.mxu0 %v958
          %v1165 = vpop.f32.mrf.mxu0
          %v1166 = vadd.f32 0.0, %v1165
          %v1167 = vpop.f32.mrf.mxu0
          %1168 = vmatprep.mubr.f32.mxu0 0.0
          %1169 = vmatmul.mubr.f32.gmra.mxu0 %v961
          %v1170 = vpop.f32.mrf.mxu0
          %v1171 = vadd.f32 0.0, %v1170
          %v1172 = vpop.f32.mrf.mxu0
          %1173 = vmatprep.mubr.f32.mxu0 0.0
          %1174 = vmatmul.mubr.f32.gmra.mxu0 %v964
          %v1175 = vpop.f32.mrf.mxu0
          %v1176 = vadd.f32 0.0, %v1175
          %v1177 = vpop.f32.mrf.mxu0
          %1178 = vmatprep.mubr.f32.mxu0 0.0
          %1179 = vmatmul.mubr.f32.gmra.mxu0 %v967
          %v1180 = vpop.f32.mrf.mxu0
          %v1181 = vadd.f32 0.0, %v1180
          %v1182 = vpop.f32.mrf.mxu0
          %1183 = vmatprep.mubr.f32.mxu0 0.0
          %1184 = vmatmul.mubr.f32.gmra.mxu0 %v970
          %v1185 = vpop.f32.mrf.mxu0
          %v1186 = vadd.f32 0.0, %v1185
          %v1187 = vpop.f32.mrf.mxu0
          %1188 = vmatprep.mubr.f32.mxu0 0.0
          %1189 = vmatmul.mubr.f32.gmra.mxu0 %v973
          %v1190 = vpop.f32.mrf.mxu0
          %v1191 = vadd.f32 0.0, %v1190
          %v1192 = vpop.f32.mrf.mxu0
          %1193 = vmatprep.mubr.f32.mxu0 0.0
          %1194 = vmatmul.mubr.f32.gmra.mxu0 %v976
          %v1195 = vpop.f32.mrf.mxu0
          %v1196 = vadd.f32 0.0, %v1195
          %v1197 = vpop.f32.mrf.mxu0
          %1198 = vmatprep.mubr.f32.mxu0 0.0
          %1199 = vmatmul.mubr.f32.gmra.mxu0 %v979
          %v1200 = vpop.f32.mrf.mxu0
          %v1201 = vadd.f32 0.0, %v1200
          %v1202 = vpop.f32.mrf.mxu0
          %1203 = vmatprep.mubr.f32.mxu0 0.0
          %1204 = vmatmul.mubr.f32.gmra.mxu0 %v982
          %v1205 = vpop.f32.mrf.mxu0
          %v1206 = vadd.f32 0.0, %v1205
          %v1207 = vpop.f32.mrf.mxu0
          %1208 = vmatprep.mubr.f32.mxu0 0.0
          %1209 = vmatmul.mubr.f32.gmra.mxu0 %v985
          %v1210 = vpop.f32.mrf.mxu0
          %v1211 = vadd.f32 0.0, %v1210
          %v1212 = vpop.f32.mrf.mxu0
          %1213 = vmatprep.mubr.f32.mxu0 0.0
          %1214 = vmatmul.mubr.f32.gmra.mxu0 %v988
          %v1215 = vpop.f32.mrf.mxu0
          %v1216 = vadd.f32 0.0, %v1215
          %v1217 = vpop.f32.mrf.mxu0
          %1218 = vdwg.mxu0
          %v1219 = vadd.f32 %v489, %v1061
          %v1220 = vadd.f32 %v494, %v1066
          %v1221 = vadd.f32 %v499, %v1071
          %v1222 = vadd.f32 %v504, %v1076
          %v1223 = vadd.f32 %v509, %v1081
          %v1224 = vadd.f32 %v514, %v1086
          %v1225 = vadd.f32 %v519, %v1091
          %v1226 = vadd.f32 %v524, %v1096
          %v1227 = vadd.f32 %v529, %v1101
          %v1228 = vadd.f32 %v534, %v1106
          %v1229 = vadd.f32 %v539, %v1111
          %v1230 = vadd.f32 %v544, %v1116
          %v1231 = vadd.f32 %v549, %v1121
          %v1232 = vadd.f32 %v554, %v1126
          %v1233 = vadd.f32 %v559, %v1131
          %v1234 = vadd.f32 %v564, %v1136
          %v1235 = vadd.f32 %v569, %v1141
          %v1236 = vadd.f32 %v574, %v1146
          %v1237 = vadd.f32 %v579, %v1151
          %v1238 = vadd.f32 %v584, %v1156
          %v1239 = vadd.f32 %v589, %v1161
          %v1240 = vadd.f32 %v594, %v1166
          %v1241 = vadd.f32 %v599, %v1171
          %v1242 = vadd.f32 %v604, %v1176
          %v1243 = vadd.f32 %v609, %v1181
          %v1244 = vadd.f32 %v614, %v1186
          %v1245 = vadd.f32 %v619, %v1191
          %v1246 = vadd.f32 %v624, %v1196
          %v1247 = vadd.f32 %v629, %v1201
          %v1248 = vadd.f32 %v634, %v1206
          %v1249 = vadd.f32 %v639, %v1211
          %v1250 = vadd.f32 %v644, %v1216
          %1251 = vst [vmem:[%s361] sm:$0xff] %v1219
          %1252 = vst [vmem:[%s361 + $0x8] sm:$0xff] %v1220
          %1253 = vst [vmem:[%s361 + $0x10] sm:$0xff] %v1221
          %1254 = vst [vmem:[%s361 + $0x18] sm:$0xff] %v1222
          %1255 = vst [vmem:[%s361 + $0x20] sm:$0xff] %v1223
          %1256 = vst [vmem:[%s361 + $0x28] sm:$0xff] %v1224
          %1257 = vst [vmem:[%s361 + $0x30] sm:$0xff] %v1225
          %1258 = vst [vmem:[%s361 + $0x38] sm:$0xff] %v1226
          %1259 = vst [vmem:[%s361 + $0x40] sm:$0xff] %v1227
          %1260 = vst [vmem:[%s361 + $0x48] sm:$0xff] %v1228
          %1261 = vst [vmem:[%s361 + $0x50] sm:$0xff] %v1229
          %1262 = vst [vmem:[%s361 + $0x58] sm:$0xff] %v1230
          %1263 = vst [vmem:[%s361 + $0x60] sm:$0xff] %v1231
          %1264 = vst [vmem:[%s361 + $0x68] sm:$0xff] %v1232
          %1265 = vst [vmem:[%s361 + $0x70] sm:$0xff] %v1233
          %1266 = vst [vmem:[%s361 + $0x78] sm:$0xff] %v1234
          %1267 = vst [vmem:[%s361 + $0x80] sm:$0xff] %v1235
          %1268 = vst [vmem:[%s361 + $0x88] sm:$0xff] %v1236
          %1269 = vst [vmem:[%s361 + $0x90] sm:$0xff] %v1237
          %1270 = vst [vmem:[%s361 + $0x98] sm:$0xff] %v1238
          %1271 = vst [vmem:[%s361 + $0xa0] sm:$0xff] %v1239
          %1272 = vst [vmem:[%s361 + $0xa8] sm:$0xff] %v1240
          %1273 = vst [vmem:[%s361 + $0xb0] sm:$0xff] %v1241
          %1274 = vst [vmem:[%s361 + $0xb8] sm:$0xff] %v1242
          %1275 = vst [vmem:[%s361 + $0xc0] sm:$0xff] %v1243
          %1276 = vst [vmem:[%s361 + $0xc8] sm:$0xff] %v1244
          %1277 = vst [vmem:[%s361 + $0xd0] sm:$0xff] %v1245
          %1278 = vst [vmem:[%s361 + $0xd8] sm:$0xff] %v1246
          %1279 = vst [vmem:[%s361 + $0xe0] sm:$0xff] %v1247
          %1280 = vst [vmem:[%s361 + $0xe8] sm:$0xff] %v1248
          %1281 = vst [vmem:[%s361 + $0xf0] sm:$0xff] %v1249
          %1282 = vst [vmem:[%s361 + $0xf8] sm:$0xff] %v1250
        $region60: #{tpu_custom_call.1} parent=47 // pred_fallthru
          _
        %p1283 = scmp.eq.s32.totalorder %s31, 1
        // Predicated region
        $region61: #{tpu_custom_call.1} parent=47 // pred_check
          %p1284 = pneg %p1283
        $region62: #{tpu_custom_call.1} parent=47 // pred_check_branch
          %1286 = sbr.rel (%p1284) target = $region64
        $region63: #{tpu_custom_call.1} parent=47 // pred_region
          %1287 = vst [vmem:[%s361] sm:$0xff] %v489
          %1288 = vst [vmem:[%s361 + $0x8] sm:$0xff] %v494
          %1289 = vst [vmem:[%s361 + $0x10] sm:$0xff] %v499
          %1290 = vst [vmem:[%s361 + $0x18] sm:$0xff] %v504
          %1291 = vst [vmem:[%s361 + $0x20] sm:$0xff] %v509
          %1292 = vst [vmem:[%s361 + $0x28] sm:$0xff] %v514
          %1293 = vst [vmem:[%s361 + $0x30] sm:$0xff] %v519
          %1294 = vst [vmem:[%s361 + $0x38] sm:$0xff] %v524
          %1295 = vst [vmem:[%s361 + $0x40] sm:$0xff] %v529
          %1296 = vst [vmem:[%s361 + $0x48] sm:$0xff] %v534
          %1297 = vst [vmem:[%s361 + $0x50] sm:$0xff] %v539
          %1298 = vst [vmem:[%s361 + $0x58] sm:$0xff] %v544
          %1299 = vst [vmem:[%s361 + $0x60] sm:$0xff] %v549
          %1300 = vst [vmem:[%s361 + $0x68] sm:$0xff] %v554
          %1301 = vst [vmem:[%s361 + $0x70] sm:$0xff] %v559
          %1302 = vst [vmem:[%s361 + $0x78] sm:$0xff] %v564
          %1303 = vst [vmem:[%s361 + $0x80] sm:$0xff] %v569
          %1304 = vst [vmem:[%s361 + $0x88] sm:$0xff] %v574
          %1305 = vst [vmem:[%s361 + $0x90] sm:$0xff] %v579
          %1306 = vst [vmem:[%s361 + $0x98] sm:$0xff] %v584
          %1307 = vst [vmem:[%s361 + $0xa0] sm:$0xff] %v589
          %1308 = vst [vmem:[%s361 + $0xa8] sm:$0xff] %v594
          %1309 = vst [vmem:[%s361 + $0xb0] sm:$0xff] %v599
          %1310 = vst [vmem:[%s361 + $0xb8] sm:$0xff] %v604
          %1311 = vst [vmem:[%s361 + $0xc0] sm:$0xff] %v609
          %1312 = vst [vmem:[%s361 + $0xc8] sm:$0xff] %v614
          %1313 = vst [vmem:[%s361 + $0xd0] sm:$0xff] %v619
          %1314 = vst [vmem:[%s361 + $0xd8] sm:$0xff] %v624
          %1315 = vst [vmem:[%s361 + $0xe0] sm:$0xff] %v629
          %1316 = vst [vmem:[%s361 + $0xe8] sm:$0xff] %v634
          %1317 = vst [vmem:[%s361 + $0xf0] sm:$0xff] %v639
          %1318 = vst [vmem:[%s361 + $0xf8] sm:$0xff] %v644
        $region64: #{tpu_custom_call.1} parent=47 // pred_fallthru
          _
        %p1319 = scmp.eq.s32.totalorder %s31, 2
        // Predicated region
        $region65: #{tpu_custom_call.1} parent=47 // pred_check
          %p1320 = pneg %p1319
        $region66: #{tpu_custom_call.1} parent=47 // pred_check_branch
          %1322 = sbr.rel (%p1320) target = $region68
        $region67: #{tpu_custom_call.1} parent=47 // pred_region
          %v1323 = vld [vmem:[%s4] sm:$0xff]
          %v1324 = vld [vmem:[%s4 + $0x8] sm:$0xff]
          %v1325 = vld [vmem:[%s4 + $0x10] sm:$0xff]
          %v1326 = vld [vmem:[%s4 + $0x18] sm:$0xff]
          %v1327 = vld [vmem:[%s4 + $0x20] sm:$0xff]
          %v1328 = vld [vmem:[%s4 + $0x28] sm:$0xff]
          %v1329 = vld [vmem:[%s4 + $0x30] sm:$0xff]
          %v1330 = vld [vmem:[%s4 + $0x38] sm:$0xff]
          %v1331 = vld [vmem:[%s4 + $0x40] sm:$0xff]
          %v1332 = vld [vmem:[%s4 + $0x48] sm:$0xff]
          %v1333 = vld [vmem:[%s4 + $0x50] sm:$0xff]
          %v1334 = vld [vmem:[%s4 + $0x58] sm:$0xff]
          %v1335 = vld [vmem:[%s4 + $0x60] sm:$0xff]
          %v1336 = vld [vmem:[%s4 + $0x68] sm:$0xff]
          %v1337 = vld [vmem:[%s4 + $0x70] sm:$0xff]
          %v1338 = vld [vmem:[%s4 + $0x78] sm:$0xff]
          %1339 = vmatprep.subr.mxu0 0.0
          %1340 = vmatpush1.msra.mxu0 %v1338
          %1341 = vmatprep.subr.mxu0 0.0
          %1342 = vmatpush1.msra.mxu0 %v1337
          %1343 = vmatprep.subr.mxu0 0.0
          %1344 = vmatpush1.msra.mxu0 %v1336
          %1345 = vmatprep.subr.mxu0 0.0
          %1346 = vmatpush1.msra.mxu0 %v1335
          %1347 = vmatprep.subr.mxu0 0.0
          %1348 = vmatpush1.msra.mxu0 %v1334
          %1349 = vmatprep.subr.mxu0 0.0
          %1350 = vmatpush1.msra.mxu0 %v1333
          %1351 = vmatprep.subr.mxu0 0.0
          %1352 = vmatpush1.msra.mxu0 %v1332
          %1353 = vmatprep.subr.mxu0 0.0
          %1354 = vmatpush1.msra.mxu0 %v1331
          %1355 = vmatprep.subr.mxu0 0.0
          %1356 = vmatpush1.msra.mxu0 %v1330
          %1357 = vmatprep.subr.mxu0 0.0
          %1358 = vmatpush1.msra.mxu0 %v1329
          %1359 = vmatprep.subr.mxu0 0.0
          %1360 = vmatpush1.msra.mxu0 %v1328
          %1361 = vmatprep.subr.mxu0 0.0
          %1362 = vmatpush1.msra.mxu0 %v1327
          %1363 = vmatprep.subr.mxu0 0.0
          %1364 = vmatpush1.msra.mxu0 %v1326
          %1365 = vmatprep.subr.mxu0 0.0
          %1366 = vmatpush1.msra.mxu0 %v1325
          %1367 = vmatprep.subr.mxu0 0.0
          %1368 = vmatpush1.msra.mxu0 %v1324
          %1369 = vmatprep.subr.mxu0 0.0
          %1370 = vmatpush1.msra.mxu0 %v1323
          %1371 = vmatprep.subr.mxu0 0.0
          %1372 = vmatpush2.msra.mxu0 0.0
          %1373 = vmatprep.subr.mxu0 0.0
          %1374 = vmatpush2.msra.mxu0 0.0
          %1375 = vmatprep.subr.mxu0 0.0
          %1376 = vmatpush2.msra.mxu0 0.0
          %1377 = vmatprep.subr.mxu0 0.0
          %1378 = vmatpush2.msra.mxu0 0.0
          %1379 = vmatprep.subr.mxu0 0.0
          %1380 = vmatpush2.msra.mxu0 0.0
          %1381 = vmatprep.subr.mxu0 0.0
          %1382 = vmatpush2.msra.mxu0 0.0
          %1383 = vmatprep.subr.mxu0 0.0
          %1384 = vmatpush2.msra.mxu0 0.0
          %1385 = vmatprep.subr.mxu0 0.0
          %1386 = vmatpush2.msra.mxu0 0.0
          %1387 = vmatprep.subr.mxu0 0.0
          %1388 = vmatpush2.msra.mxu0 0.0
          %1389 = vmatprep.subr.mxu0 0.0
          %1390 = vmatpush2.msra.mxu0 0.0
          %1391 = vmatprep.subr.mxu0 0.0
          %1392 = vmatpush2.msra.mxu0 0.0
          %1393 = vmatprep.subr.mxu0 0.0
          %1394 = vmatpush2.msra.mxu0 0.0
          %1395 = vmatprep.subr.mxu0 0.0
          %1396 = vmatpush2.msra.mxu0 0.0
          %1397 = vmatprep.subr.mxu0 0.0
          %1398 = vmatpush2.msra.mxu0 0.0
          %1399 = vmatprep.subr.mxu0 0.0
          %1400 = vmatpush2.msra.mxu0 0.0
          %1401 = vmatprep.subr.mxu0 0.0
          %1402 = vmatpush2.msra.mxu0 0.0
          %1403 = vmatprep.mubr.f32.mxu0 0.0
          %1404 = vmatmul.mubr.f32.gmra.mxu0 %v367
          %v1405 = vpop.f32.mrf.mxu0
          %v1406 = vadd.f32 0.0, %v1405
          %v1407 = vpop.f32.mrf.mxu0
          %1408 = vmatprep.mubr.f32.mxu0 0.0
          %1409 = vmatmul.mubr.f32.gmra.mxu0 %v368
          %v1410 = vpop.f32.mrf.mxu0
          %v1411 = vadd.f32 0.0, %v1410
          %v1412 = vpop.f32.mrf.mxu0
          %1413 = vmatprep.mubr.f32.mxu0 0.0
          %1414 = vmatmul.mubr.f32.gmra.mxu0 %v369
          %v1415 = vpop.f32.mrf.mxu0
          %v1416 = vadd.f32 0.0, %v1415
          %v1417 = vpop.f32.mrf.mxu0
          %1418 = vmatprep.mubr.f32.mxu0 0.0
          %1419 = vmatmul.mubr.f32.gmra.mxu0 %v370
          %v1420 = vpop.f32.mrf.mxu0
          %v1421 = vadd.f32 0.0, %v1420
          %v1422 = vpop.f32.mrf.mxu0
          %1423 = vmatprep.mubr.f32.mxu0 0.0
          %1424 = vmatmul.mubr.f32.gmra.mxu0 %v371
          %v1425 = vpop.f32.mrf.mxu0
          %v1426 = vadd.f32 0.0, %v1425
          %v1427 = vpop.f32.mrf.mxu0
          %1428 = vmatprep.mubr.f32.mxu0 0.0
          %1429 = vmatmul.mubr.f32.gmra.mxu0 %v372
          %v1430 = vpop.f32.mrf.mxu0
          %v1431 = vadd.f32 0.0, %v1430
          %v1432 = vpop.f32.mrf.mxu0
          %1433 = vmatprep.mubr.f32.mxu0 0.0
          %1434 = vmatmul.mubr.f32.gmra.mxu0 %v373
          %v1435 = vpop.f32.mrf.mxu0
          %v1436 = vadd.f32 0.0, %v1435
          %v1437 = vpop.f32.mrf.mxu0
          %1438 = vmatprep.mubr.f32.mxu0 0.0
          %1439 = vmatmul.mubr.f32.gmra.mxu0 %v374
          %v1440 = vpop.f32.mrf.mxu0
          %v1441 = vadd.f32 0.0, %v1440
          %v1442 = vpop.f32.mrf.mxu0
          %1443 = vmatprep.mubr.f32.mxu0 0.0
          %1444 = vmatmul.mubr.f32.gmra.mxu0 %v375
          %v1445 = vpop.f32.mrf.mxu0
          %v1446 = vadd.f32 0.0, %v1445
          %v1447 = vpop.f32.mrf.mxu0
          %1448 = vmatprep.mubr.f32.mxu0 0.0
          %1449 = vmatmul.mubr.f32.gmra.mxu0 %v376
          %v1450 = vpop.f32.mrf.mxu0
          %v1451 = vadd.f32 0.0, %v1450
          %v1452 = vpop.f32.mrf.mxu0
          %1453 = vmatprep.mubr.f32.mxu0 0.0
          %1454 = vmatmul.mubr.f32.gmra.mxu0 %v377
          %v1455 = vpop.f32.mrf.mxu0
          %v1456 = vadd.f32 0.0, %v1455
          %v1457 = vpop.f32.mrf.mxu0
          %1458 = vmatprep.mubr.f32.mxu0 0.0
          %1459 = vmatmul.mubr.f32.gmra.mxu0 %v378
          %v1460 = vpop.f32.mrf.mxu0
          %v1461 = vadd.f32 0.0, %v1460
          %v1462 = vpop.f32.mrf.mxu0
          %1463 = vmatprep.mubr.f32.mxu0 0.0
          %1464 = vmatmul.mubr.f32.gmra.mxu0 %v379
          %v1465 = vpop.f32.mrf.mxu0
          %v1466 = vadd.f32 0.0, %v1465
          %v1467 = vpop.f32.mrf.mxu0
          %1468 = vmatprep.mubr.f32.mxu0 0.0
          %1469 = vmatmul.mubr.f32.gmra.mxu0 %v380
          %v1470 = vpop.f32.mrf.mxu0
          %v1471 = vadd.f32 0.0, %v1470
          %v1472 = vpop.f32.mrf.mxu0
          %1473 = vmatprep.mubr.f32.mxu0 0.0
          %1474 = vmatmul.mubr.f32.gmra.mxu0 %v381
          %v1475 = vpop.f32.mrf.mxu0
          %v1476 = vadd.f32 0.0, %v1475
          %v1477 = vpop.f32.mrf.mxu0
          %1478 = vmatprep.mubr.f32.mxu0 0.0
          %1479 = vmatmul.mubr.f32.gmra.mxu0 %v382
          %v1480 = vpop.f32.mrf.mxu0
          %v1481 = vadd.f32 0.0, %v1480
          %v1482 = vpop.f32.mrf.mxu0
          %1483 = vmatprep.mubr.f32.mxu0 0.0
          %1484 = vmatmul.mubr.f32.gmra.mxu0 %v383
          %v1485 = vpop.f32.mrf.mxu0
          %v1486 = vadd.f32 0.0, %v1485
          %v1487 = vpop.f32.mrf.mxu0
          %1488 = vmatprep.mubr.f32.mxu0 0.0
          %1489 = vmatmul.mubr.f32.gmra.mxu0 %v384
          %v1490 = vpop.f32.mrf.mxu0
          %v1491 = vadd.f32 0.0, %v1490
          %v1492 = vpop.f32.mrf.mxu0
          %1493 = vmatprep.mubr.f32.mxu0 0.0
          %1494 = vmatmul.mubr.f32.gmra.mxu0 %v385
          %v1495 = vpop.f32.mrf.mxu0
          %v1496 = vadd.f32 0.0, %v1495
          %v1497 = vpop.f32.mrf.mxu0
          %1498 = vmatprep.mubr.f32.mxu0 0.0
          %1499 = vmatmul.mubr.f32.gmra.mxu0 %v386
          %v1500 = vpop.f32.mrf.mxu0
          %v1501 = vadd.f32 0.0, %v1500
          %v1502 = vpop.f32.mrf.mxu0
          %1503 = vmatprep.mubr.f32.mxu0 0.0
          %1504 = vmatmul.mubr.f32.gmra.mxu0 %v387
          %v1505 = vpop.f32.mrf.mxu0
          %v1506 = vadd.f32 0.0, %v1505
          %v1507 = vpop.f32.mrf.mxu0
          %1508 = vmatprep.mubr.f32.mxu0 0.0
          %1509 = vmatmul.mubr.f32.gmra.mxu0 %v388
          %v1510 = vpop.f32.mrf.mxu0
          %v1511 = vadd.f32 0.0, %v1510
          %v1512 = vpop.f32.mrf.mxu0
          %1513 = vmatprep.mubr.f32.mxu0 0.0
          %1514 = vmatmul.mubr.f32.gmra.mxu0 %v389
          %v1515 = vpop.f32.mrf.mxu0
          %v1516 = vadd.f32 0.0, %v1515
          %v1517 = vpop.f32.mrf.mxu0
          %1518 = vmatprep.mubr.f32.mxu0 0.0
          %1519 = vmatmul.mubr.f32.gmra.mxu0 %v390
          %v1520 = vpop.f32.mrf.mxu0
          %v1521 = vadd.f32 0.0, %v1520
          %v1522 = vpop.f32.mrf.mxu0
          %1523 = vmatprep.mubr.f32.mxu0 0.0
          %1524 = vmatmul.mubr.f32.gmra.mxu0 %v391
          %v1525 = vpop.f32.mrf.mxu0
          %v1526 = vadd.f32 0.0, %v1525
          %v1527 = vpop.f32.mrf.mxu0
          %1528 = vmatprep.mubr.f32.mxu0 0.0
          %1529 = vmatmul.mubr.f32.gmra.mxu0 %v392
          %v1530 = vpop.f32.mrf.mxu0
          %v1531 = vadd.f32 0.0, %v1530
          %v1532 = vpop.f32.mrf.mxu0
          %1533 = vmatprep.mubr.f32.mxu0 0.0
          %1534 = vmatmul.mubr.f32.gmra.mxu0 %v393
          %v1535 = vpop.f32.mrf.mxu0
          %v1536 = vadd.f32 0.0, %v1535
          %v1537 = vpop.f32.mrf.mxu0
          %1538 = vmatprep.mubr.f32.mxu0 0.0
          %1539 = vmatmul.mubr.f32.gmra.mxu0 %v394
          %v1540 = vpop.f32.mrf.mxu0
          %v1541 = vadd.f32 0.0, %v1540
          %v1542 = vpop.f32.mrf.mxu0
          %1543 = vmatprep.mubr.f32.mxu0 0.0
          %1544 = vmatmul.mubr.f32.gmra.mxu0 %v395
          %v1545 = vpop.f32.mrf.mxu0
          %v1546 = vadd.f32 0.0, %v1545
          %v1547 = vpop.f32.mrf.mxu0
          %1548 = vmatprep.mubr.f32.mxu0 0.0
          %1549 = vmatmul.mubr.f32.gmra.mxu0 %v396
          %v1550 = vpop.f32.mrf.mxu0
          %v1551 = vadd.f32 0.0, %v1550
          %v1552 = vpop.f32.mrf.mxu0
          %1553 = vmatprep.mubr.f32.mxu0 0.0
          %1554 = vmatmul.mubr.f32.gmra.mxu0 %v397
          %v1555 = vpop.f32.mrf.mxu0
          %v1556 = vadd.f32 0.0, %v1555
          %v1557 = vpop.f32.mrf.mxu0
          %1558 = vmatprep.mubr.f32.mxu0 0.0
          %1559 = vmatmul.mubr.f32.gmra.mxu0 %v398
          %v1560 = vpop.f32.mrf.mxu0
          %v1561 = vadd.f32 0.0, %v1560
          %v1562 = vpop.f32.mrf.mxu0
          %1563 = vdwg.mxu0
          %v1564 = vld [vmem:[%s6] sm:$0xf]
          %vm1565 = vcmask 31744
          %v1567 = vsel %vm1565, %v1406, 0
          %v1570 = vsel %vm1565, %v1411, 0
          %v1573 = vsel %vm1565, %v1416, 0
          %v1576 = vsel %vm1565, %v1421, 0
          %v1579 = vsel %vm1565, %v1426, 0
          %v1582 = vsel %vm1565, %v1431, 0
          %v1585 = vsel %vm1565, %v1436, 0
          %v1588 = vsel %vm1565, %v1441, 0
          %v1591 = vsel %vm1565, %v1446, 0
          %v1594 = vsel %vm1565, %v1451, 0
          %v1597 = vsel %vm1565, %v1456, 0
          %v1600 = vsel %vm1565, %v1461, 0
          %v1603 = vsel %vm1565, %v1466, 0
          %v1606 = vsel %vm1565, %v1471, 0
          %v1609 = vsel %vm1565, %v1476, 0
          %v1612 = vsel %vm1565, %v1481, 0
          %v1615 = vsel %vm1565, %v1486, 0
          %v1618 = vsel %vm1565, %v1491, 0
          %v1621 = vsel %vm1565, %v1496, 0
          %v1624 = vsel %vm1565, %v1501, 0
          %v1627 = vsel %vm1565, %v1506, 0
          %v1630 = vsel %vm1565, %v1511, 0
          %v1633 = vsel %vm1565, %v1516, 0
          %v1636 = vsel %vm1565, %v1521, 0
          %v1639 = vsel %vm1565, %v1526, 0
          %v1642 = vsel %vm1565, %v1531, 0
          %v1645 = vsel %vm1565, %v1536, 0
          %v1648 = vsel %vm1565, %v1541, 0
          %v1651 = vsel %vm1565, %v1546, 0
          %v1654 = vsel %vm1565, %v1551, 0
          %v1657 = vsel %vm1565, %v1556, 0
          %v1660 = vsel %vm1565, %v1561, 0
          %vm1662 = vcmask 1043456
          %v1664 = vsel %vm1662, %v1564, 0
          %1666 = vmatprep.subr.mxu0 0.0
          %1667 = vmatpush1.msra.mxu0 0.0
          %1668 = vmatprep.subr.mxu0 0.0
          %1669 = vmatpush1.msra.mxu0 0.0
          %1670 = vmatprep.subr.mxu0 0.0
          %1671 = vmatpush1.msra.mxu0 0.0
          %1672 = vmatprep.subr.mxu0 0.0
          %1673 = vmatpush1.msra.mxu0 0.0
          %1674 = vmatprep.subr.mxu0 0.0
          %1675 = vmatpush1.msra.mxu0 0.0
          %1676 = vmatprep.subr.mxu0 0.0
          %1677 = vmatpush1.msra.mxu0 0.0
          %1678 = vmatprep.subr.mxu0 0.0
          %1679 = vmatpush1.msra.mxu0 0.0
          %1680 = vmatprep.subr.mxu0 0.0
          %1681 = vmatpush1.msra.mxu0 0.0
          %1682 = vmatprep.subr.mxu0 0.0
          %1683 = vmatpush1.msra.mxu0 0.0
          %1684 = vmatprep.subr.mxu0 0.0
          %1685 = vmatpush1.msra.mxu0 0.0
          %1686 = vmatprep.subr.mxu0 0.0
          %1687 = vmatpush1.msra.mxu0 0.0
          %1688 = vmatprep.subr.mxu0 0.0
          %1689 = vmatpush1.msra.mxu0 0.0
          %1690 = vmatprep.subr.mxu0 0.0
          %1691 = vmatpush1.msra.mxu0 0.0
          %1692 = vmatprep.subr.mxu0 0.0
          %1693 = vmatpush1.msra.mxu0 0.0
          %1694 = vmatprep.subr.mxu0 0.0
          %1695 = vmatpush1.msra.mxu0 0.0
          %1696 = vmatprep.subr.mxu0 0.0
          %1697 = vmatpush1.msra.mxu0 %v1664
          %1698 = vmatprep.subr.mxu0 0.0
          %1699 = vmatpush2.msra.mxu0 0.0
          %1700 = vmatprep.subr.mxu0 0.0
          %1701 = vmatpush2.msra.mxu0 0.0
          %1702 = vmatprep.subr.mxu0 0.0
          %1703 = vmatpush2.msra.mxu0 0.0
          %1704 = vmatprep.subr.mxu0 0.0
          %1705 = vmatpush2.msra.mxu0 0.0
          %1706 = vmatprep.subr.mxu0 0.0
          %1707 = vmatpush2.msra.mxu0 0.0
          %1708 = vmatprep.subr.mxu0 0.0
          %1709 = vmatpush2.msra.mxu0 0.0
          %1710 = vmatprep.subr.mxu0 0.0
          %1711 = vmatpush2.msra.mxu0 0.0
          %1712 = vmatprep.subr.mxu0 0.0
          %1713 = vmatpush2.msra.mxu0 0.0
          %1714 = vmatprep.subr.mxu0 0.0
          %1715 = vmatpush2.msra.mxu0 0.0
          %1716 = vmatprep.subr.mxu0 0.0
          %1717 = vmatpush2.msra.mxu0 0.0
          %1718 = vmatprep.subr.mxu0 0.0
          %1719 = vmatpush2.msra.mxu0 0.0
          %1720 = vmatprep.subr.mxu0 0.0
          %1721 = vmatpush2.msra.mxu0 0.0
          %1722 = vmatprep.subr.mxu0 0.0
          %1723 = vmatpush2.msra.mxu0 0.0
          %1724 = vmatprep.subr.mxu0 0.0
          %1725 = vmatpush2.msra.mxu0 0.0
          %1726 = vmatprep.subr.mxu0 0.0
          %1727 = vmatpush2.msra.mxu0 0.0
          %1728 = vmatprep.subr.mxu0 0.0
          %1729 = vmatpush2.msra.mxu0 0.0
          %1730 = vmatprep.mubr.f32.mxu0 0.0
          %1731 = vmatmul.mubr.f32.gmra.mxu0 %v1567
          %v1732 = vpop.f32.mrf.mxu0
          %v1733 = vadd.f32 0.0, %v1732
          %v1734 = vpop.f32.mrf.mxu0
          %1735 = vmatprep.mubr.f32.mxu0 0.0
          %1736 = vmatmul.mubr.f32.gmra.mxu0 %v1570
          %v1737 = vpop.f32.mrf.mxu0
          %v1738 = vadd.f32 0.0, %v1737
          %v1739 = vpop.f32.mrf.mxu0
          %1740 = vmatprep.mubr.f32.mxu0 0.0
          %1741 = vmatmul.mubr.f32.gmra.mxu0 %v1573
          %v1742 = vpop.f32.mrf.mxu0
          %v1743 = vadd.f32 0.0, %v1742
          %v1744 = vpop.f32.mrf.mxu0
          %1745 = vmatprep.mubr.f32.mxu0 0.0
          %1746 = vmatmul.mubr.f32.gmra.mxu0 %v1576
          %v1747 = vpop.f32.mrf.mxu0
          %v1748 = vadd.f32 0.0, %v1747
          %v1749 = vpop.f32.mrf.mxu0
          %1750 = vmatprep.mubr.f32.mxu0 0.0
          %1751 = vmatmul.mubr.f32.gmra.mxu0 %v1579
          %v1752 = vpop.f32.mrf.mxu0
          %v1753 = vadd.f32 0.0, %v1752
          %v1754 = vpop.f32.mrf.mxu0
          %1755 = vmatprep.mubr.f32.mxu0 0.0
          %1756 = vmatmul.mubr.f32.gmra.mxu0 %v1582
          %v1757 = vpop.f32.mrf.mxu0
          %v1758 = vadd.f32 0.0, %v1757
          %v1759 = vpop.f32.mrf.mxu0
          %1760 = vmatprep.mubr.f32.mxu0 0.0
          %1761 = vmatmul.mubr.f32.gmra.mxu0 %v1585
          %v1762 = vpop.f32.mrf.mxu0
          %v1763 = vadd.f32 0.0, %v1762
          %v1764 = vpop.f32.mrf.mxu0
          %1765 = vmatprep.mubr.f32.mxu0 0.0
          %1766 = vmatmul.mubr.f32.gmra.mxu0 %v1588
          %v1767 = vpop.f32.mrf.mxu0
          %v1768 = vadd.f32 0.0, %v1767
          %v1769 = vpop.f32.mrf.mxu0
          %1770 = vmatprep.mubr.f32.mxu0 0.0
          %1771 = vmatmul.mubr.f32.gmra.mxu0 %v1591
          %v1772 = vpop.f32.mrf.mxu0
          %v1773 = vadd.f32 0.0, %v1772
          %v1774 = vpop.f32.mrf.mxu0
          %1775 = vmatprep.mubr.f32.mxu0 0.0
          %1776 = vmatmul.mubr.f32.gmra.mxu0 %v1594
          %v1777 = vpop.f32.mrf.mxu0
          %v1778 = vadd.f32 0.0, %v1777
          %v1779 = vpop.f32.mrf.mxu0
          %1780 = vmatprep.mubr.f32.mxu0 0.0
          %1781 = vmatmul.mubr.f32.gmra.mxu0 %v1597
          %v1782 = vpop.f32.mrf.mxu0
          %v1783 = vadd.f32 0.0, %v1782
          %v1784 = vpop.f32.mrf.mxu0
          %1785 = vmatprep.mubr.f32.mxu0 0.0
          %1786 = vmatmul.mubr.f32.gmra.mxu0 %v1600
          %v1787 = vpop.f32.mrf.mxu0
          %v1788 = vadd.f32 0.0, %v1787
          %v1789 = vpop.f32.mrf.mxu0
          %1790 = vmatprep.mubr.f32.mxu0 0.0
          %1791 = vmatmul.mubr.f32.gmra.mxu0 %v1603
          %v1792 = vpop.f32.mrf.mxu0
          %v1793 = vadd.f32 0.0, %v1792
          %v1794 = vpop.f32.mrf.mxu0
          %1795 = vmatprep.mubr.f32.mxu0 0.0
          %1796 = vmatmul.mubr.f32.gmra.mxu0 %v1606
          %v1797 = vpop.f32.mrf.mxu0
          %v1798 = vadd.f32 0.0, %v1797
          %v1799 = vpop.f32.mrf.mxu0
          %1800 = vmatprep.mubr.f32.mxu0 0.0
          %1801 = vmatmul.mubr.f32.gmra.mxu0 %v1609
          %v1802 = vpop.f32.mrf.mxu0
          %v1803 = vadd.f32 0.0, %v1802
          %v1804 = vpop.f32.mrf.mxu0
          %1805 = vmatprep.mubr.f32.mxu0 0.0
          %1806 = vmatmul.mubr.f32.gmra.mxu0 %v1612
          %v1807 = vpop.f32.mrf.mxu0
          %v1808 = vadd.f32 0.0, %v1807
          %v1809 = vpop.f32.mrf.mxu0
          %1810 = vmatprep.mubr.f32.mxu0 0.0
          %1811 = vmatmul.mubr.f32.gmra.mxu0 %v1615
          %v1812 = vpop.f32.mrf.mxu0
          %v1813 = vadd.f32 0.0, %v1812
          %v1814 = vpop.f32.mrf.mxu0
          %1815 = vmatprep.mubr.f32.mxu0 0.0
          %1816 = vmatmul.mubr.f32.gmra.mxu0 %v1618
          %v1817 = vpop.f32.mrf.mxu0
          %v1818 = vadd.f32 0.0, %v1817
          %v1819 = vpop.f32.mrf.mxu0
          %1820 = vmatprep.mubr.f32.mxu0 0.0
          %1821 = vmatmul.mubr.f32.gmra.mxu0 %v1621
          %v1822 = vpop.f32.mrf.mxu0
          %v1823 = vadd.f32 0.0, %v1822
          %v1824 = vpop.f32.mrf.mxu0
          %1825 = vmatprep.mubr.f32.mxu0 0.0
          %1826 = vmatmul.mubr.f32.gmra.mxu0 %v1624
          %v1827 = vpop.f32.mrf.mxu0
          %v1828 = vadd.f32 0.0, %v1827
          %v1829 = vpop.f32.mrf.mxu0
          %1830 = vmatprep.mubr.f32.mxu0 0.0
          %1831 = vmatmul.mubr.f32.gmra.mxu0 %v1627
          %v1832 = vpop.f32.mrf.mxu0
          %v1833 = vadd.f32 0.0, %v1832
          %v1834 = vpop.f32.mrf.mxu0
          %1835 = vmatprep.mubr.f32.mxu0 0.0
          %1836 = vmatmul.mubr.f32.gmra.mxu0 %v1630
          %v1837 = vpop.f32.mrf.mxu0
          %v1838 = vadd.f32 0.0, %v1837
          %v1839 = vpop.f32.mrf.mxu0
          %1840 = vmatprep.mubr.f32.mxu0 0.0
          %1841 = vmatmul.mubr.f32.gmra.mxu0 %v1633
          %v1842 = vpop.f32.mrf.mxu0
          %v1843 = vadd.f32 0.0, %v1842
          %v1844 = vpop.f32.mrf.mxu0
          %1845 = vmatprep.mubr.f32.mxu0 0.0
          %1846 = vmatmul.mubr.f32.gmra.mxu0 %v1636
          %v1847 = vpop.f32.mrf.mxu0
          %v1848 = vadd.f32 0.0, %v1847
          %v1849 = vpop.f32.mrf.mxu0
          %1850 = vmatprep.mubr.f32.mxu0 0.0
          %1851 = vmatmul.mubr.f32.gmra.mxu0 %v1639
          %v1852 = vpop.f32.mrf.mxu0
          %v1853 = vadd.f32 0.0, %v1852
          %v1854 = vpop.f32.mrf.mxu0
          %1855 = vmatprep.mubr.f32.mxu0 0.0
          %1856 = vmatmul.mubr.f32.gmra.mxu0 %v1642
          %v1857 = vpop.f32.mrf.mxu0
          %v1858 = vadd.f32 0.0, %v1857
          %v1859 = vpop.f32.mrf.mxu0
          %1860 = vmatprep.mubr.f32.mxu0 0.0
          %1861 = vmatmul.mubr.f32.gmra.mxu0 %v1645
          %v1862 = vpop.f32.mrf.mxu0
          %v1863 = vadd.f32 0.0, %v1862
          %v1864 = vpop.f32.mrf.mxu0
          %1865 = vmatprep.mubr.f32.mxu0 0.0
          %1866 = vmatmul.mubr.f32.gmra.mxu0 %v1648
          %v1867 = vpop.f32.mrf.mxu0
          %v1868 = vadd.f32 0.0, %v1867
          %v1869 = vpop.f32.mrf.mxu0
          %1870 = vmatprep.mubr.f32.mxu0 0.0
          %1871 = vmatmul.mubr.f32.gmra.mxu0 %v1651
          %v1872 = vpop.f32.mrf.mxu0
          %v1873 = vadd.f32 0.0, %v1872
          %v1874 = vpop.f32.mrf.mxu0
          %1875 = vmatprep.mubr.f32.mxu0 0.0
          %1876 = vmatmul.mubr.f32.gmra.mxu0 %v1654
          %v1877 = vpop.f32.mrf.mxu0
          %v1878 = vadd.f32 0.0, %v1877
          %v1879 = vpop.f32.mrf.mxu0
          %1880 = vmatprep.mubr.f32.mxu0 0.0
          %1881 = vmatmul.mubr.f32.gmra.mxu0 %v1657
          %v1882 = vpop.f32.mrf.mxu0
          %v1883 = vadd.f32 0.0, %v1882
          %v1884 = vpop.f32.mrf.mxu0
          %1885 = vmatprep.mubr.f32.mxu0 0.0
          %1886 = vmatmul.mubr.f32.gmra.mxu0 %v1660
          %v1887 = vpop.f32.mrf.mxu0
          %v1888 = vadd.f32 0.0, %v1887
          %v1889 = vpop.f32.mrf.mxu0
          %1890 = vdwg.mxu0
          %v1891 = vadd.f32 %v489, %v1733
          %v1892 = vadd.f32 %v494, %v1738
          %v1893 = vadd.f32 %v499, %v1743
          %v1894 = vadd.f32 %v504, %v1748
          %v1895 = vadd.f32 %v509, %v1753
          %v1896 = vadd.f32 %v514, %v1758
          %v1897 = vadd.f32 %v519, %v1763
          %v1898 = vadd.f32 %v524, %v1768
          %v1899 = vadd.f32 %v529, %v1773
          %v1900 = vadd.f32 %v534, %v1778
          %v1901 = vadd.f32 %v539, %v1783
          %v1902 = vadd.f32 %v544, %v1788
          %v1903 = vadd.f32 %v549, %v1793
          %v1904 = vadd.f32 %v554, %v1798
          %v1905 = vadd.f32 %v559, %v1803
          %v1906 = vadd.f32 %v564, %v1808
          %v1907 = vadd.f32 %v569, %v1813
          %v1908 = vadd.f32 %v574, %v1818
          %v1909 = vadd.f32 %v579, %v1823
          %v1910 = vadd.f32 %v584, %v1828
          %v1911 = vadd.f32 %v589, %v1833
          %v1912 = vadd.f32 %v594, %v1838
          %v1913 = vadd.f32 %v599, %v1843
          %v1914 = vadd.f32 %v604, %v1848
          %v1915 = vadd.f32 %v609, %v1853
          %v1916 = vadd.f32 %v614, %v1858
          %v1917 = vadd.f32 %v619, %v1863
          %v1918 = vadd.f32 %v624, %v1868
          %v1919 = vadd.f32 %v629, %v1873
          %v1920 = vadd.f32 %v634, %v1878
          %v1921 = vadd.f32 %v639, %v1883
          %v1922 = vadd.f32 %v644, %v1888
          %1923 = vst [vmem:[%s361] sm:$0xff] %v1891
          %1924 = vst [vmem:[%s361 + $0x8] sm:$0xff] %v1892
          %1925 = vst [vmem:[%s361 + $0x10] sm:$0xff] %v1893
          %1926 = vst [vmem:[%s361 + $0x18] sm:$0xff] %v1894
          %1927 = vst [vmem:[%s361 + $0x20] sm:$0xff] %v1895
          %1928 = vst [vmem:[%s361 + $0x28] sm:$0xff] %v1896
          %1929 = vst [vmem:[%s361 + $0x30] sm:$0xff] %v1897
          %1930 = vst [vmem:[%s361 + $0x38] sm:$0xff] %v1898
          %1931 = vst [vmem:[%s361 + $0x40] sm:$0xff] %v1899
          %1932 = vst [vmem:[%s361 + $0x48] sm:$0xff] %v1900
          %1933 = vst [vmem:[%s361 + $0x50] sm:$0xff] %v1901
          %1934 = vst [vmem:[%s361 + $0x58] sm:$0xff] %v1902
          %1935 = vst [vmem:[%s361 + $0x60] sm:$0xff] %v1903
          %1936 = vst [vmem:[%s361 + $0x68] sm:$0xff] %v1904
          %1937 = vst [vmem:[%s361 + $0x70] sm:$0xff] %v1905
          %1938 = vst [vmem:[%s361 + $0x78] sm:$0xff] %v1906
          %1939 = vst [vmem:[%s361 + $0x80] sm:$0xff] %v1907
          %1940 = vst [vmem:[%s361 + $0x88] sm:$0xff] %v1908
          %1941 = vst [vmem:[%s361 + $0x90] sm:$0xff] %v1909
          %1942 = vst [vmem:[%s361 + $0x98] sm:$0xff] %v1910
          %1943 = vst [vmem:[%s361 + $0xa0] sm:$0xff] %v1911
          %1944 = vst [vmem:[%s361 + $0xa8] sm:$0xff] %v1912
          %1945 = vst [vmem:[%s361 + $0xb0] sm:$0xff] %v1913
          %1946 = vst [vmem:[%s361 + $0xb8] sm:$0xff] %v1914
          %1947 = vst [vmem:[%s361 + $0xc0] sm:$0xff] %v1915
          %1948 = vst [vmem:[%s361 + $0xc8] sm:$0xff] %v1916
          %1949 = vst [vmem:[%s361 + $0xd0] sm:$0xff] %v1917
          %1950 = vst [vmem:[%s361 + $0xd8] sm:$0xff] %v1918
          %1951 = vst [vmem:[%s361 + $0xe0] sm:$0xff] %v1919
          %1952 = vst [vmem:[%s361 + $0xe8] sm:$0xff] %v1920
          %1953 = vst [vmem:[%s361 + $0xf0] sm:$0xff] %v1921
          %1954 = vst [vmem:[%s361 + $0xf8] sm:$0xff] %v1922
        $region68: #{tpu_custom_call.1} parent=47 // pred_fallthru
          _
        %s1955 = sand.u32 %s211, 1
        %s1956 = scalar_lea.sflag [#allocation4], %s1955
        %s1957 = sand.u32 %s211, 1
        %s1958 = smul.addr %s1957, 256
        %s1959 = scalar_lea.vmem [#allocation7], %s1958
        // Predicated region
        $region69: #{tpu_custom_call.1} parent=47 // pred_check
          %p1960 = pneg %p221
        $region70: #{tpu_custom_call.1} parent=47 // pred_check_branch
          %1962 = sbr.rel (%p1960) target = $region72
        $region71: #{tpu_custom_call.1} parent=47 // pred_region
          %s1963 = smul.u32 32, %s32
          %s1965 = ssub.s32 4096, 4096
          %1966 = vsyncadd %s1956, %s1965
          %s1967 = smul.addr %s1963, 3
          %s1968 = sadd.s32 %s31, %s1967
          %s1969 = smul.addr %s1968, 128
          %s1970 = scalar_lea.hbm %s7, %s1969
          %s1971 = sshll.u32 %s1959, 4
          %s1972 = int_to_ptr.vmem [resolvable:$true] %s1971
          %1977 = dma.vmem_to_hbm [thread:$0]  %s1972, 4096, %s1970, %s1956, 128, 384, 8
        $region72: #{tpu_custom_call.1} parent=47 // pred_fallthru
          _
      $region48: #{tpu_custom_call.1} parent=5 // pred_fallthru
        _
      %p1978 = scmp.le.s32.totalorder 2, %s22
      // Predicated region
      $region73: #{tpu_custom_call.1} parent=5 // pred_check
        %p1979 = pneg %p1978
      $region74: #{tpu_custom_call.1} parent=5 // pred_check_branch
        %1981 = sbr.rel (%p1979) target = $region76
      $region75: #{tpu_custom_call.1} parent=5 // pred_region
        %s1982 = ssub.s32 %s22, 2
        // Predicated region
        $region77: #{tpu_custom_call.1} parent=75 // pred_check
          %p1983 = pneg %p227
        $region78: #{tpu_custom_call.1} parent=75 // pred_check_branch
          %1985 = sbr.rel (%p1983) target = $region80
        $region79: #{tpu_custom_call.1} parent=75 // pred_region
          %s1986 = sand.u32 %s212, 1
          %s1987 = scalar_lea.sflag [#allocation4], %s1986
          %s1988 = sand.u32 %s212, 1
          %s1989 = smul.addr %s1988, 256
          %s1990 = scalar_lea.vmem [#allocation7], %s1989
          %1991 = dma.done %s1987, 4096
        $region80: #{tpu_custom_call.1} parent=75 // pred_fallthru
          _
      $region76: #{tpu_custom_call.1} parent=5 // pred_fallthru
        _
    $region6: #{tpu_custom_call.1} parent=1 // loop_footer
      %s26 = sadd.s32 1, %s22
    $region7: #{tpu_custom_call.1} parent=1 // loop_footer_branch
      %21 = sbr.rel target = $region3
    $region8: #{tpu_custom_call.1} parent=1 // loop_exit
      _
    %1992 = vsyncpa [#allocation3], 1
    %s1993 = scalar_lea.sflag [#allocation3], 1
    %1994 = vsyncpa %s1993, 1
    %1995 = vsyncpa [#allocation6], 1
    %s1996 = scalar_lea.sflag [#allocation6], 1
    %1997 = vsyncpa %s1996, 1
    %1998 = vsyncpa [#allocation4], 1
    %s1999 = scalar_lea.sflag [#allocation4], 1
    %2000 = vsyncpa %s1999, 1

</llo_original>
